<compile_context>
chip_gen: v6e
topology: v6e:2x2x1
jax: 0.10.0
libtpu: 0.0.40
codegen_flags: <defaults>
</compile_context>

<pallas_src>
import functools

import jax
import jax.numpy as jnp
from jax import lax
from jax.experimental import pallas as pl
from jax.experimental.pallas import tpu as pltpu

E_LAMBDA = 1e-4
_MAX_DC = 4          # largest horizontal tap offset (dilation 4 * |kj-1| = 4)


def _simam(p, hw):
    """simam_module on a (C, H*W) slab (float32), vectorised over channels."""
    n = hw - 1
    mu = jnp.mean(p, axis=-1, keepdims=True)
    d2 = (p - mu) ** 2
    denom = 4.0 * (jnp.sum(d2, axis=-1, keepdims=True) / n + E_LAMBDA)
    y = d2 * pl.reciprocal(denom, approx=False) + 0.5
    # sigmoid = exp (EUP) + exact reciprocal; approx=True would cost ~1e-3 acc.
    return p * pl.reciprocal(1.0 + jnp.exp(-y), approx=False)


def _bfam_fused_kernel(x_ref, masks_ref, wcat_ref, bcat_ref, wf_ref, bf_ref,
                       fscale_ref, fshift_ref, wo_ref, bo_ref, oscale_ref,
                       oshift_ref, o_ref, *, C1, H, W):
    HW = H * W
    C2 = 2 * C1

    x = x_ref[0].astype(jnp.float32)                       # (2*C1, HW)

    mask_cache = {}

    def col_mask(dc):
        if dc not in mask_cache:
            mask_cache[dc] = masks_ref[dc + _MAX_DC:dc + _MAX_DC + 1, :]
        return mask_cache[dc]                              # (1, HW)

    def shift(v, dr, dc):
        """v viewed as (C, H, W): value at (r+dr, c+dc), zero outside the image.

        Flat lane shift by dr*W + dc (static slice + zero fill) plus a
        column-validity mask; row overflow always lands outside [0, HW) and is
        handled by the zero fill."""
        delta = dr * W + dc
        c = v.shape[0]
        if delta > 0:
            sh = jnp.concatenate(
                [v[:, delta:], jnp.zeros((c, delta), jnp.float32)], axis=1)
        elif delta < 0:
            sh = jnp.concatenate(
                [jnp.zeros((c, -delta), jnp.float32), v[:, :delta]], axis=1)
        else:
            sh = v
        if dc == 0:
            return sh
        return sh * col_mask(dc)

    # ---- 4 grouped dilated 3x3 convs: per-dilation im2col + MXU matmul ----
    cat_parts = []
    for di, d in enumerate((1, 2, 3, 4)):
        taps = [shift(x, (ki - 1) * d, (kj - 1) * d)
                for ki in range(3) for kj in range(3)]
        im2col = jnp.concatenate(taps, axis=0)             # (9*2*C1, HW)
        w_d = wcat_ref[di * C1:(di + 1) * C1, :]           # (C1, 9*2*C1)
        cat_parts.append(
            jnp.dot(w_d, im2col, preferred_element_type=jnp.float32))
    cat = jnp.concatenate(cat_parts, axis=0) + bcat_ref[...]   # (4*C1, HW)

    # ---- fuse: 1x1 conv as one channel matmul + folded BN + ReLU ----
    fuse = jnp.dot(wf_ref[...], cat,
                   preferred_element_type=jnp.float32) + bf_ref[...]
    fuse = jnp.maximum(fuse * fscale_ref[...] + fshift_ref[...], 0.0)  # (C1,HW)

    # ---- simam branches (vectorised over channels) + elementwise combine ----
    i1 = x[:C1, :]
    i2 = x[C1:, :]
    s = (_simam(fuse, HW) + i1 + i2
         + _simam(i2, HW) * fuse + _simam(i1, HW) * fuse)   # (C1, HW)

    # ---- out: 3x3 conv via in-kernel im2col + MXU matmul + folded BN + ReLU --
    taps = [shift(s, ki - 1, kj - 1) for ki in range(3) for kj in range(3)]
    im2col_s = jnp.concatenate(taps, axis=0)               # (9*C1, HW)
    o = jnp.dot(wo_ref[...], im2col_s,
                preferred_element_type=jnp.float32) + bo_ref[...]
    o = jnp.maximum(o * oscale_ref[...] + oshift_ref[...], 0.0)

    # ---- final simam, lane-dense (256-wide) store ----
    o_ref[0] = _simam(o, HW).astype(o_ref.dtype)


def bfam_forward(inp1, inp2, params):
    B, C1, H, W = inp1.shape
    HW = H * W
    C2 = 2 * C1
    Cout = params["bo"].shape[0]

    # glue: concat channels, flatten (H, W) -> lane-dense H*W
    x = jnp.concatenate([inp1, inp2], axis=1).reshape(B, C2, HW)

    # column-validity masks for flat shifts, dc in [-_MAX_DC, _MAX_DC]
    col = jnp.arange(HW, dtype=jnp.int32) % W
    dcs = jnp.arange(-_MAX_DC, _MAX_DC + 1, dtype=jnp.int32)
    shift_masks = ((col[None, :] + dcs[:, None] >= 0) &
                   (col[None, :] + dcs[:, None] < W)).astype(jnp.float32)

    # grouped dilated conv weights -> block-sparse (4*C1, 9*2*C1) matrix whose
    # columns are [tap-major, input-channel-minor] to match the im2col layout
    w_stack = jnp.stack([params["w1"], params["w2"],
                         params["w3"], params["w4"]])       # (4, C1, 2, 3, 3)
    wcat = jnp.zeros((4, C1, 9, C2), jnp.float32)
    for k in range(C1):
        for ic in range(2):
            wcat = wcat.at[:, k, :, 2 * k + ic].set(
                w_stack[:, k, ic].reshape(4, 9))
    wcat = wcat.reshape(4 * C1, 9 * C2)
    bcat = jnp.concatenate([params["b1"], params["b2"],
                            params["b3"], params["b4"]]).reshape(4 * C1, 1)

    # 3x3 "out" conv weights -> (Cout, 9*C1), columns [tap-major, channel-minor]
    wo2d = jnp.transpose(params["wo"], (0, 2, 3, 1)).reshape(Cout, 9 * C1)

    def col2(v):                       # per-channel scalars as (C, 1)
        return v.reshape(-1, 1)

    def full_spec(shape):              # whole (small) array in VMEM every step
        zeros = (0,) * len(shape)
        return pl.BlockSpec(shape, lambda b: zeros)

    kernel = functools.partial(_bfam_fused_kernel, C1=C1, H=H, W=W)

    out_flat = pl.pallas_call(
        kernel,
        out_shape=jax.ShapeDtypeStruct((B, Cout, HW), jnp.float32),
        grid=(B,),
        in_specs=[
            pl.BlockSpec((1, C2, HW), lambda b: (b, 0, 0)),
            full_spec((2 * _MAX_DC + 1, HW)),
            full_spec((4 * C1, 9 * C2)),
            full_spec((4 * C1, 1)),
            full_spec((C1, 4 * C1)),
            full_spec((C1, 1)),
            full_spec((C1, 1)),
            full_spec((C1, 1)),
            full_spec((Cout, 9 * C1)),
            full_spec((Cout, 1)),
            full_spec((Cout, 1)),
            full_spec((Cout, 1)),
        ],
        out_specs=pl.BlockSpec((1, Cout, HW), lambda b: (b, 0, 0)),
        compiler_params=pltpu.CompilerParams(
            dimension_semantics=("parallel",)),
    )(x, shift_masks, wcat, bcat, params["wf"], col2(params["bf"]),
      col2(params["fscale"]), col2(params["fshift"]),
      wo2d, col2(params["bo"]), col2(params["oscale"]), col2(params["oshift"]))

    return out_flat.reshape(B, Cout, H, W)


# ------------------------- pure-JAX reference ------------------------------
def _simam_ref(x):
    _, _, h, w = x.shape
    n = h * w - 1
    mu = jnp.mean(x, axis=(2, 3), keepdims=True)
    d2 = (x - mu) ** 2
    y = d2 / (4.0 * (jnp.sum(d2, axis=(2, 3), keepdims=True) / n + E_LAMBDA)) + 0.5
    return x * jax.nn.sigmoid(y)


def bfam_reference(inp1, inp2, p):
    hp = lax.Precision.HIGHEST
    x = jnp.concatenate([inp1, inp2], axis=1)

    def gconv(w, b, d):
        y = lax.conv_general_dilated(
            x, w, window_strides=(1, 1), padding=[(d, d), (d, d)],
            rhs_dilation=(d, d), dimension_numbers=("NCHW", "OIHW", "NCHW"),
            feature_group_count=w.shape[0], precision=hp)
        return y + b[None, :, None, None]

    cat = jnp.concatenate([gconv(p["w1"], p["b1"], 1), gconv(p["w2"], p["b2"], 2),
                           gconv(p["w3"], p["b3"], 3), gconv(p["w4"], p["b4"], 4)],
                          axis=1)
    fuse = (jnp.einsum("oc,bchw->bohw", p["wf"], cat, precision=hp)
            + p["bf"][None, :, None, None])
    fuse = jnp.maximum(fuse * p["fscale"][None, :, None, None]
                       + p["fshift"][None, :, None, None], 0.0)
    i1m = _simam_ref(inp1) * fuse
    i2m = _simam_ref(inp2) * fuse
    s = _simam_ref(fuse) + inp1 + inp2 + i2m + i1m
    o = lax.conv_general_dilated(
        s, p["wo"], window_strides=(1, 1), padding=[(1, 1), (1, 1)],
        dimension_numbers=("NCHW", "OIHW", "NCHW"),
        precision=hp) + p["bo"][None, :, None, None]
    o = jnp.maximum(o * p["oscale"][None, :, None, None]
                    + p["oshift"][None, :, None, None], 0.0)
    return _simam_ref(o)


# ------------------------- parameter init ----------------------------------
def init_params(inp_ch, out_ch, key):
    out1 = inp_ch // 2
    ks = jax.random.split(key, 12)
    p = {}
    for i, name in enumerate(["w1", "w2", "w3", "w4"]):
        p[name] = 0.2 * jax.random.normal(ks[i], (out1, 2, 3, 3), jnp.float32)
    for i, name in enumerate(["b1", "b2", "b3", "b4"]):
        p[name] = 0.1 * jax.random.normal(ks[4 + i], (out1,), jnp.float32)
    p["wf"] = 0.2 * jax.random.normal(ks[8], (out1, 4 * out1), jnp.float32)
    p["bf"] = 0.1 * jax.random.normal(ks[9], (out1,), jnp.float32)
    p["wo"] = 0.2 * jax.random.normal(ks[10], (out_ch, out1, 3, 3), jnp.float32)
    p["bo"] = 0.1 * jax.random.normal(ks[11], (out_ch,), jnp.float32)
    # BatchNorm2d eval-mode fold (PyTorch defaults: gamma=1, beta=0, mean=0, var=1)
    eps = 1e-5
    p["fscale"] = jnp.ones((out1,), jnp.float32) / jnp.sqrt(1.0 + eps)
    p["fshift"] = jnp.zeros((out1,), jnp.float32)
    p["oscale"] = jnp.ones((out_ch,), jnp.float32) / jnp.sqrt(1.0 + eps)
    p["oshift"] = jnp.zeros((out_ch,), jnp.float32)
    return p


if __name__ == "__main__":
    B, C_half, H, W = 2, 4, 16, 16          # inp1/inp2: (2, 4, 16, 16)
    inp_ch = 2 * C_half                      # BFAM(inp=8, out=4)
    out_ch = 4

    key = jax.random.PRNGKey(0)
    k1, k2 = jax.random.split(key)
    inp1 = jax.random.normal(k1, (B, C_half, H, W), jnp.float32)
    inp2 = jax.random.normal(k2, (B, C_half, H, W), jnp.float32)

    params = init_params(inp_ch, out_ch, jax.random.PRNGKey(42))

    out = jax.jit(bfam_forward)(inp1, inp2, params)
    out = jax.block_until_ready(out)

    ref = bfam_reference(inp1, inp2, params)
    assert out.shape == (B, out_ch, H, W), out.shape
    err = float(jnp.max(jnp.abs(out - ref)))
    assert err < 1e-4, f"max abs error {err}"
    print("KERNEL_OK")
</pallas_src>

<mosaic_0001>
module attributes {stable_mosaic.version = 11 : i64} {
  func.func @_bfam_fused_kernel(%arg0: i32, %arg1: memref<1x8x256xf32, #tpu.memory_space<vmem>>, %arg2: memref<9x256xf32, #tpu.memory_space<vmem>>, %arg3: memref<16x72xf32, #tpu.memory_space<vmem>>, %arg4: memref<16x1xf32, #tpu.memory_space<vmem>>, %arg5: memref<4x16xf32, #tpu.memory_space<vmem>>, %arg6: memref<4x1xf32, #tpu.memory_space<vmem>>, %arg7: memref<4x1xf32, #tpu.memory_space<vmem>>, %arg8: memref<4x1xf32, #tpu.memory_space<vmem>>, %arg9: memref<4x36xf32, #tpu.memory_space<vmem>>, %arg10: memref<4x1xf32, #tpu.memory_space<vmem>>, %arg11: memref<4x1xf32, #tpu.memory_space<vmem>>, %arg12: memref<4x1xf32, #tpu.memory_space<vmem>>, %arg13: memref<1x4x256xf32, #tpu.memory_space<vmem>>) attributes {dimension_semantics = [#tpu.dimension_semantics<parallel>], iteration_bounds = array<i64: 2>, scalar_prefetch = 0 : i64, scratch_operands = 0 : i64, tpu.core_type = #tpu.core_type<tc>, window_params = [{transform_indices = @transform_0, window_bounds = array<i64: 1, 8, 256>}, {pipeline_mode = #tpu.pipeline_mode<synchronous>, transform_indices = @transform_1, window_bounds = array<i64: 9, 256>}, {pipeline_mode = #tpu.pipeline_mode<synchronous>, transform_indices = @transform_2, window_bounds = array<i64: 16, 72>}, {pipeline_mode = #tpu.pipeline_mode<synchronous>, transform_indices = @transform_3, window_bounds = array<i64: 16, 1>}, {pipeline_mode = #tpu.pipeline_mode<synchronous>, transform_indices = @transform_4, window_bounds = array<i64: 4, 16>}, {pipeline_mode = #tpu.pipeline_mode<synchronous>, transform_indices = @transform_5, window_bounds = array<i64: 4, 1>}, {pipeline_mode = #tpu.pipeline_mode<synchronous>, transform_indices = @transform_6, window_bounds = array<i64: 4, 1>}, {pipeline_mode = #tpu.pipeline_mode<synchronous>, transform_indices = @transform_7, window_bounds = array<i64: 4, 1>}, {pipeline_mode = #tpu.pipeline_mode<synchronous>, transform_indices = @transform_8, window_bounds = array<i64: 4, 36>}, {pipeline_mode = #tpu.pipeline_mode<synchronous>, transform_indices = @transform_9, window_bounds = array<i64: 4, 1>}, {pipeline_mode = #tpu.pipeline_mode<synchronous>, transform_indices = @transform_10, window_bounds = array<i64: 4, 1>}, {pipeline_mode = #tpu.pipeline_mode<synchronous>, transform_indices = @transform_11, window_bounds = array<i64: 4, 1>}, {transform_indices = @transform_12, window_bounds = array<i64: 1, 4, 256>}]} {
    %c0 = arith.constant 0 : index
    %c0_0 = arith.constant 0 : index
    %c0_1 = arith.constant 0 : index
    %0 = vector.load %arg1[%c0, %c0_0, %c0_1] : memref<1x8x256xf32, #tpu.memory_space<vmem>>, vector<1x8x256xf32>
    %1 = vector.shape_cast %0 : vector<1x8x256xf32> to vector<8x256xf32>
    %cst = arith.constant 0.000000e+00 : f32
    %2 = vector.broadcast %cst : f32 to vector<8x17xf32>
    %3 = vector.extract_strided_slice %1 {offsets = [0, 0], sizes = [8, 239], strides = [1, 1]} : vector<8x256xf32> to vector<8x239xf32>
    %4 = tpu.concatenate %2, %3 in 1 : vector<8x17xf32>, vector<8x239xf32> -> vector<8x256xf32>
    %c3 = arith.constant 3 : index
    %c0_2 = arith.constant 0 : index
    %5 = vector.load %arg2[%c3, %c0_2] : memref<9x256xf32, #tpu.memory_space<vmem>>, vector<1x256xf32>
    %6 = vector.broadcast %5 : vector<1x256xf32> to vector<8x256xf32>
    %7 = arith.mulf %4, %6 : vector<8x256xf32>
    %cst_3 = arith.constant 0.000000e+00 : f32
    %8 = vector.broadcast %cst_3 : f32 to vector<8x16xf32>
    %9 = vector.extract_strided_slice %1 {offsets = [0, 0], sizes = [8, 240], strides = [1, 1]} : vector<8x256xf32> to vector<8x240xf32>
    %10 = tpu.concatenate %8, %9 in 1 : vector<8x16xf32>, vector<8x240xf32> -> vector<8x256xf32>
    %cst_4 = arith.constant 0.000000e+00 : f32
    %11 = vector.broadcast %cst_4 : f32 to vector<8x15xf32>
    %12 = vector.extract_strided_slice %1 {offsets = [0, 0], sizes = [8, 241], strides = [1, 1]} : vector<8x256xf32> to vector<8x241xf32>
    %13 = tpu.concatenate %11, %12 in 1 : vector<8x15xf32>, vector<8x241xf32> -> vector<8x256xf32>
    %c5 = arith.constant 5 : index
    %c0_5 = arith.constant 0 : index
    %14 = vector.load %arg2[%c5, %c0_5] : memref<9x256xf32, #tpu.memory_space<vmem>>, vector<1x256xf32>
    %15 = vector.broadcast %14 : vector<1x256xf32> to vector<8x256xf32>
    %16 = arith.mulf %13, %15 : vector<8x256xf32>
    %cst_6 = arith.constant 0.000000e+00 : f32
    %17 = vector.broadcast %cst_6 : f32 to vector<8x1xf32>
    %18 = vector.extract_strided_slice %1 {offsets = [0, 0], sizes = [8, 255], strides = [1, 1]} : vector<8x256xf32> to vector<8x255xf32>
    %19 = tpu.concatenate %17, %18 in 1 : vector<8x1xf32>, vector<8x255xf32> -> vector<8x256xf32>
    %20 = vector.broadcast %5 : vector<1x256xf32> to vector<8x256xf32>
    %21 = arith.mulf %19, %20 : vector<8x256xf32>
    %22 = vector.extract_strided_slice %1 {offsets = [0, 1], sizes = [8, 255], strides = [1, 1]} : vector<8x256xf32> to vector<8x255xf32>
    %cst_7 = arith.constant 0.000000e+00 : f32
    %23 = vector.broadcast %cst_7 : f32 to vector<8x1xf32>
    %24 = tpu.concatenate %22, %23 in 1 : vector<8x255xf32>, vector<8x1xf32> -> vector<8x256xf32>
    %25 = vector.broadcast %14 : vector<1x256xf32> to vector<8x256xf32>
    %26 = arith.mulf %24, %25 : vector<8x256xf32>
    %27 = vector.extract_strided_slice %1 {offsets = [0, 15], sizes = [8, 241], strides = [1, 1]} : vector<8x256xf32> to vector<8x241xf32>
    %cst_8 = arith.constant 0.000000e+00 : f32
    %28 = vector.broadcast %cst_8 : f32 to vector<8x15xf32>
    %29 = tpu.concatenate %27, %28 in 1 : vector<8x241xf32>, vector<8x15xf32> -> vector<8x256xf32>
    %30 = vector.broadcast %5 : vector<1x256xf32> to vector<8x256xf32>
    %31 = arith.mulf %29, %30 : vector<8x256xf32>
    %32 = vector.extract_strided_slice %1 {offsets = [0, 16], sizes = [8, 240], strides = [1, 1]} : vector<8x256xf32> to vector<8x240xf32>
    %cst_9 = arith.constant 0.000000e+00 : f32
    %33 = vector.broadcast %cst_9 : f32 to vector<8x16xf32>
    %34 = tpu.concatenate %32, %33 in 1 : vector<8x240xf32>, vector<8x16xf32> -> vector<8x256xf32>
    %35 = vector.extract_strided_slice %1 {offsets = [0, 17], sizes = [8, 239], strides = [1, 1]} : vector<8x256xf32> to vector<8x239xf32>
    %cst_10 = arith.constant 0.000000e+00 : f32
    %36 = vector.broadcast %cst_10 : f32 to vector<8x17xf32>
    %37 = tpu.concatenate %35, %36 in 1 : vector<8x239xf32>, vector<8x17xf32> -> vector<8x256xf32>
    %38 = vector.broadcast %14 : vector<1x256xf32> to vector<8x256xf32>
    %39 = arith.mulf %37, %38 : vector<8x256xf32>
    %40 = tpu.concatenate %7, %10, %16, %21, %1, %26, %31, %34, %39 in 0 : vector<8x256xf32>, vector<8x256xf32>, vector<8x256xf32>, vector<8x256xf32>, vector<8x256xf32>, vector<8x256xf32>, vector<8x256xf32>, vector<8x256xf32>, vector<8x256xf32> -> vector<72x256xf32>
    %c0_11 = arith.constant 0 : index
    %c0_12 = arith.constant 0 : index
    %41 = vector.load %arg3[%c0_11, %c0_12] : memref<16x72xf32, #tpu.memory_space<vmem>>, vector<4x72xf32>
    %cst_13 = arith.constant dense<0.000000e+00> : vector<4x256xf32>
    %42 = tpu.matmul %41, %40, %cst_13 {dimension_numbers = #tpu.dot_dimension_numbers<[1], [0], [0], [1], [0, 0, 1, 1], [], []>} : vector<4x72xf32>, vector<72x256xf32>, vector<4x256xf32> -> vector<4x256xf32>
    %cst_14 = arith.constant 0.000000e+00 : f32
    %43 = vector.broadcast %cst_14 : f32 to vector<8x34xf32>
    %44 = vector.extract_strided_slice %1 {offsets = [0, 0], sizes = [8, 222], strides = [1, 1]} : vector<8x256xf32> to vector<8x222xf32>
    %45 = tpu.concatenate %43, %44 in 1 : vector<8x34xf32>, vector<8x222xf32> -> vector<8x256xf32>
    %c2 = arith.constant 2 : index
    %c0_15 = arith.constant 0 : index
    %46 = vector.load %arg2[%c2, %c0_15] : memref<9x256xf32, #tpu.memory_space<vmem>>, vector<1x256xf32>
    %47 = vector.broadcast %46 : vector<1x256xf32> to vector<8x256xf32>
    %48 = arith.mulf %45, %47 : vector<8x256xf32>
    %cst_16 = arith.constant 0.000000e+00 : f32
    %49 = vector.broadcast %cst_16 : f32 to vector<8x32xf32>
    %50 = vector.extract_strided_slice %1 {offsets = [0, 0], sizes = [8, 224], strides = [1, 1]} : vector<8x256xf32> to vector<8x224xf32>
    %51 = tpu.concatenate %49, %50 in 1 : vector<8x32xf32>, vector<8x224xf32> -> vector<8x256xf32>
    %cst_17 = arith.constant 0.000000e+00 : f32
    %52 = vector.broadcast %cst_17 : f32 to vector<8x30xf32>
    %53 = vector.extract_strided_slice %1 {offsets = [0, 0], sizes = [8, 226], strides = [1, 1]} : vector<8x256xf32> to vector<8x226xf32>
    %54 = tpu.concatenate %52, %53 in 1 : vector<8x30xf32>, vector<8x226xf32> -> vector<8x256xf32>
    %c6 = arith.constant 6 : index
    %c0_18 = arith.constant 0 : index
    %55 = vector.load %arg2[%c6, %c0_18] : memref<9x256xf32, #tpu.memory_space<vmem>>, vector<1x256xf32>
    %56 = vector.broadcast %55 : vector<1x256xf32> to vector<8x256xf32>
    %57 = arith.mulf %54, %56 : vector<8x256xf32>
    %cst_19 = arith.constant 0.000000e+00 : f32
    %58 = vector.broadcast %cst_19 : f32 to vector<8x2xf32>
    %59 = vector.extract_strided_slice %1 {offsets = [0, 0], sizes = [8, 254], strides = [1, 1]} : vector<8x256xf32> to vector<8x254xf32>
    %60 = tpu.concatenate %58, %59 in 1 : vector<8x2xf32>, vector<8x254xf32> -> vector<8x256xf32>
    %61 = vector.broadcast %46 : vector<1x256xf32> to vector<8x256xf32>
    %62 = arith.mulf %60, %61 : vector<8x256xf32>
    %63 = vector.extract_strided_slice %1 {offsets = [0, 2], sizes = [8, 254], strides = [1, 1]} : vector<8x256xf32> to vector<8x254xf32>
    %cst_20 = arith.constant 0.000000e+00 : f32
    %64 = vector.broadcast %cst_20 : f32 to vector<8x2xf32>
    %65 = tpu.concatenate %63, %64 in 1 : vector<8x254xf32>, vector<8x2xf32> -> vector<8x256xf32>
    %66 = vector.broadcast %55 : vector<1x256xf32> to vector<8x256xf32>
    %67 = arith.mulf %65, %66 : vector<8x256xf32>
    %68 = vector.extract_strided_slice %1 {offsets = [0, 30], sizes = [8, 226], strides = [1, 1]} : vector<8x256xf32> to vector<8x226xf32>
    %cst_21 = arith.constant 0.000000e+00 : f32
    %69 = vector.broadcast %cst_21 : f32 to vector<8x30xf32>
    %70 = tpu.concatenate %68, %69 in 1 : vector<8x226xf32>, vector<8x30xf32> -> vector<8x256xf32>
    %71 = vector.broadcast %46 : vector<1x256xf32> to vector<8x256xf32>
    %72 = arith.mulf %70, %71 : vector<8x256xf32>
    %73 = vector.extract_strided_slice %1 {offsets = [0, 32], sizes = [8, 224], strides = [1, 1]} : vector<8x256xf32> to vector<8x224xf32>
    %cst_22 = arith.constant 0.000000e+00 : f32
    %74 = vector.broadcast %cst_22 : f32 to vector<8x32xf32>
    %75 = tpu.concatenate %73, %74 in 1 : vector<8x224xf32>, vector<8x32xf32> -> vector<8x256xf32>
    %76 = vector.extract_strided_slice %1 {offsets = [0, 34], sizes = [8, 222], strides = [1, 1]} : vector<8x256xf32> to vector<8x222xf32>
    %cst_23 = arith.constant 0.000000e+00 : f32
    %77 = vector.broadcast %cst_23 : f32 to vector<8x34xf32>
    %78 = tpu.concatenate %76, %77 in 1 : vector<8x222xf32>, vector<8x34xf32> -> vector<8x256xf32>
    %79 = vector.broadcast %55 : vector<1x256xf32> to vector<8x256xf32>
    %80 = arith.mulf %78, %79 : vector<8x256xf32>
    %81 = tpu.concatenate %48, %51, %57, %62, %1, %67, %72, %75, %80 in 0 : vector<8x256xf32>, vector<8x256xf32>, vector<8x256xf32>, vector<8x256xf32>, vector<8x256xf32>, vector<8x256xf32>, vector<8x256xf32>, vector<8x256xf32>, vector<8x256xf32> -> vector<72x256xf32>
    %c4 = arith.constant 4 : index
    %c0_24 = arith.constant 0 : index
    %82 = vector.load %arg3[%c4, %c0_24] : memref<16x72xf32, #tpu.memory_space<vmem>>, vector<4x72xf32>
    %cst_25 = arith.constant dense<0.000000e+00> : vector<4x256xf32>
    %83 = tpu.matmul %82, %81, %cst_25 {dimension_numbers = #tpu.dot_dimension_numbers<[1], [0], [0], [1], [0, 0, 1, 1], [], []>} : vector<4x72xf32>, vector<72x256xf32>, vector<4x256xf32> -> vector<4x256xf32>
    %cst_26 = arith.constant 0.000000e+00 : f32
    %84 = vector.broadcast %cst_26 : f32 to vector<8x51xf32>
    %85 = vector.extract_strided_slice %1 {offsets = [0, 0], sizes = [8, 205], strides = [1, 1]} : vector<8x256xf32> to vector<8x205xf32>
    %86 = tpu.concatenate %84, %85 in 1 : vector<8x51xf32>, vector<8x205xf32> -> vector<8x256xf32>
    %c1 = arith.constant 1 : index
    %c0_27 = arith.constant 0 : index
    %87 = vector.load %arg2[%c1, %c0_27] : memref<9x256xf32, #tpu.memory_space<vmem>>, vector<1x256xf32>
    %88 = vector.broadcast %87 : vector<1x256xf32> to vector<8x256xf32>
    %89 = arith.mulf %86, %88 : vector<8x256xf32>
    %cst_28 = arith.constant 0.000000e+00 : f32
    %90 = vector.broadcast %cst_28 : f32 to vector<8x48xf32>
    %91 = vector.extract_strided_slice %1 {offsets = [0, 0], sizes = [8, 208], strides = [1, 1]} : vector<8x256xf32> to vector<8x208xf32>
    %92 = tpu.concatenate %90, %91 in 1 : vector<8x48xf32>, vector<8x208xf32> -> vector<8x256xf32>
    %cst_29 = arith.constant 0.000000e+00 : f32
    %93 = vector.broadcast %cst_29 : f32 to vector<8x45xf32>
    %94 = vector.extract_strided_slice %1 {offsets = [0, 0], sizes = [8, 211], strides = [1, 1]} : vector<8x256xf32> to vector<8x211xf32>
    %95 = tpu.concatenate %93, %94 in 1 : vector<8x45xf32>, vector<8x211xf32> -> vector<8x256xf32>
    %c7 = arith.constant 7 : index
    %c0_30 = arith.constant 0 : index
    %96 = vector.load %arg2[%c7, %c0_30] : memref<9x256xf32, #tpu.memory_space<vmem>>, vector<1x256xf32>
    %97 = vector.broadcast %96 : vector<1x256xf32> to vector<8x256xf32>
    %98 = arith.mulf %95, %97 : vector<8x256xf32>
    %cst_31 = arith.constant 0.000000e+00 : f32
    %99 = vector.broadcast %cst_31 : f32 to vector<8x3xf32>
    %100 = vector.extract_strided_slice %1 {offsets = [0, 0], sizes = [8, 253], strides = [1, 1]} : vector<8x256xf32> to vector<8x253xf32>
    %101 = tpu.concatenate %99, %100 in 1 : vector<8x3xf32>, vector<8x253xf32> -> vector<8x256xf32>
    %102 = vector.broadcast %87 : vector<1x256xf32> to vector<8x256xf32>
    %103 = arith.mulf %101, %102 : vector<8x256xf32>
    %104 = vector.extract_strided_slice %1 {offsets = [0, 3], sizes = [8, 253], strides = [1, 1]} : vector<8x256xf32> to vector<8x253xf32>
    %cst_32 = arith.constant 0.000000e+00 : f32
    %105 = vector.broadcast %cst_32 : f32 to vector<8x3xf32>
    %106 = tpu.concatenate %104, %105 in 1 : vector<8x253xf32>, vector<8x3xf32> -> vector<8x256xf32>
    %107 = vector.broadcast %96 : vector<1x256xf32> to vector<8x256xf32>
    %108 = arith.mulf %106, %107 : vector<8x256xf32>
    %109 = vector.extract_strided_slice %1 {offsets = [0, 45], sizes = [8, 211], strides = [1, 1]} : vector<8x256xf32> to vector<8x211xf32>
    %cst_33 = arith.constant 0.000000e+00 : f32
    %110 = vector.broadcast %cst_33 : f32 to vector<8x45xf32>
    %111 = tpu.concatenate %109, %110 in 1 : vector<8x211xf32>, vector<8x45xf32> -> vector<8x256xf32>
    %112 = vector.broadcast %87 : vector<1x256xf32> to vector<8x256xf32>
    %113 = arith.mulf %111, %112 : vector<8x256xf32>
    %114 = vector.extract_strided_slice %1 {offsets = [0, 48], sizes = [8, 208], strides = [1, 1]} : vector<8x256xf32> to vector<8x208xf32>
    %cst_34 = arith.constant 0.000000e+00 : f32
    %115 = vector.broadcast %cst_34 : f32 to vector<8x48xf32>
    %116 = tpu.concatenate %114, %115 in 1 : vector<8x208xf32>, vector<8x48xf32> -> vector<8x256xf32>
    %117 = vector.extract_strided_slice %1 {offsets = [0, 51], sizes = [8, 205], strides = [1, 1]} : vector<8x256xf32> to vector<8x205xf32>
    %cst_35 = arith.constant 0.000000e+00 : f32
    %118 = vector.broadcast %cst_35 : f32 to vector<8x51xf32>
    %119 = tpu.concatenate %117, %118 in 1 : vector<8x205xf32>, vector<8x51xf32> -> vector<8x256xf32>
    %120 = vector.broadcast %96 : vector<1x256xf32> to vector<8x256xf32>
    %121 = arith.mulf %119, %120 : vector<8x256xf32>
    %122 = tpu.concatenate %89, %92, %98, %103, %1, %108, %113, %116, %121 in 0 : vector<8x256xf32>, vector<8x256xf32>, vector<8x256xf32>, vector<8x256xf32>, vector<8x256xf32>, vector<8x256xf32>, vector<8x256xf32>, vector<8x256xf32>, vector<8x256xf32> -> vector<72x256xf32>
    %c8 = arith.constant 8 : index
    %c0_36 = arith.constant 0 : index
    %123 = vector.load %arg3[%c8, %c0_36] : memref<16x72xf32, #tpu.memory_space<vmem>>, vector<4x72xf32>
    %cst_37 = arith.constant dense<0.000000e+00> : vector<4x256xf32>
    %124 = tpu.matmul %123, %122, %cst_37 {dimension_numbers = #tpu.dot_dimension_numbers<[1], [0], [0], [1], [0, 0, 1, 1], [], []>} : vector<4x72xf32>, vector<72x256xf32>, vector<4x256xf32> -> vector<4x256xf32>
    %cst_38 = arith.constant 0.000000e+00 : f32
    %125 = vector.broadcast %cst_38 : f32 to vector<8x68xf32>
    %126 = vector.extract_strided_slice %1 {offsets = [0, 0], sizes = [8, 188], strides = [1, 1]} : vector<8x256xf32> to vector<8x188xf32>
    %127 = tpu.concatenate %125, %126 in 1 : vector<8x68xf32>, vector<8x188xf32> -> vector<8x256xf32>
    %c0_39 = arith.constant 0 : index
    %c0_40 = arith.constant 0 : index
    %128 = vector.load %arg2[%c0_39, %c0_40] : memref<9x256xf32, #tpu.memory_space<vmem>>, vector<1x256xf32>
    %129 = vector.broadcast %128 : vector<1x256xf32> to vector<8x256xf32>
    %130 = arith.mulf %127, %129 : vector<8x256xf32>
    %cst_41 = arith.constant 0.000000e+00 : f32
    %131 = vector.broadcast %cst_41 : f32 to vector<8x64xf32>
    %132 = vector.extract_strided_slice %1 {offsets = [0, 0], sizes = [8, 192], strides = [1, 1]} : vector<8x256xf32> to vector<8x192xf32>
    %133 = tpu.concatenate %131, %132 in 1 : vector<8x64xf32>, vector<8x192xf32> -> vector<8x256xf32>
    %cst_42 = arith.constant 0.000000e+00 : f32
    %134 = vector.broadcast %cst_42 : f32 to vector<8x60xf32>
    %135 = vector.extract_strided_slice %1 {offsets = [0, 0], sizes = [8, 196], strides = [1, 1]} : vector<8x256xf32> to vector<8x196xf32>
    %136 = tpu.concatenate %134, %135 in 1 : vector<8x60xf32>, vector<8x196xf32> -> vector<8x256xf32>
    %c8_43 = arith.constant 8 : index
    %c0_44 = arith.constant 0 : index
    %137 = vector.load %arg2[%c8_43, %c0_44] : memref<9x256xf32, #tpu.memory_space<vmem>>, vector<1x256xf32>
    %138 = vector.broadcast %137 : vector<1x256xf32> to vector<8x256xf32>
    %139 = arith.mulf %136, %138 : vector<8x256xf32>
    %cst_45 = arith.constant 0.000000e+00 : f32
    %140 = vector.broadcast %cst_45 : f32 to vector<8x4xf32>
    %141 = vector.extract_strided_slice %1 {offsets = [0, 0], sizes = [8, 252], strides = [1, 1]} : vector<8x256xf32> to vector<8x252xf32>
    %142 = tpu.concatenate %140, %141 in 1 : vector<8x4xf32>, vector<8x252xf32> -> vector<8x256xf32>
    %143 = vector.broadcast %128 : vector<1x256xf32> to vector<8x256xf32>
    %144 = arith.mulf %142, %143 : vector<8x256xf32>
    %145 = vector.extract_strided_slice %1 {offsets = [0, 4], sizes = [8, 252], strides = [1, 1]} : vector<8x256xf32> to vector<8x252xf32>
    %cst_46 = arith.constant 0.000000e+00 : f32
    %146 = vector.broadcast %cst_46 : f32 to vector<8x4xf32>
    %147 = tpu.concatenate %145, %146 in 1 : vector<8x252xf32>, vector<8x4xf32> -> vector<8x256xf32>
    %148 = vector.broadcast %137 : vector<1x256xf32> to vector<8x256xf32>
    %149 = arith.mulf %147, %148 : vector<8x256xf32>
    %150 = vector.extract_strided_slice %1 {offsets = [0, 60], sizes = [8, 196], strides = [1, 1]} : vector<8x256xf32> to vector<8x196xf32>
    %cst_47 = arith.constant 0.000000e+00 : f32
    %151 = vector.broadcast %cst_47 : f32 to vector<8x60xf32>
    %152 = tpu.concatenate %150, %151 in 1 : vector<8x196xf32>, vector<8x60xf32> -> vector<8x256xf32>
    %153 = vector.broadcast %128 : vector<1x256xf32> to vector<8x256xf32>
    %154 = arith.mulf %152, %153 : vector<8x256xf32>
    %155 = vector.extract_strided_slice %1 {offsets = [0, 64], sizes = [8, 192], strides = [1, 1]} : vector<8x256xf32> to vector<8x192xf32>
    %cst_48 = arith.constant 0.000000e+00 : f32
    %156 = vector.broadcast %cst_48 : f32 to vector<8x64xf32>
    %157 = tpu.concatenate %155, %156 in 1 : vector<8x192xf32>, vector<8x64xf32> -> vector<8x256xf32>
    %158 = vector.extract_strided_slice %1 {offsets = [0, 68], sizes = [8, 188], strides = [1, 1]} : vector<8x256xf32> to vector<8x188xf32>
    %cst_49 = arith.constant 0.000000e+00 : f32
    %159 = vector.broadcast %cst_49 : f32 to vector<8x68xf32>
    %160 = tpu.concatenate %158, %159 in 1 : vector<8x188xf32>, vector<8x68xf32> -> vector<8x256xf32>
    %161 = vector.broadcast %137 : vector<1x256xf32> to vector<8x256xf32>
    %162 = arith.mulf %160, %161 : vector<8x256xf32>
    %163 = tpu.concatenate %130, %133, %139, %144, %1, %149, %154, %157, %162 in 0 : vector<8x256xf32>, vector<8x256xf32>, vector<8x256xf32>, vector<8x256xf32>, vector<8x256xf32>, vector<8x256xf32>, vector<8x256xf32>, vector<8x256xf32>, vector<8x256xf32> -> vector<72x256xf32>
    %c12 = arith.constant 12 : index
    %c0_50 = arith.constant 0 : index
    %164 = vector.load %arg3[%c12, %c0_50] : memref<16x72xf32, #tpu.memory_space<vmem>>, vector<4x72xf32>
    %cst_51 = arith.constant dense<0.000000e+00> : vector<4x256xf32>
    %165 = tpu.matmul %164, %163, %cst_51 {dimension_numbers = #tpu.dot_dimension_numbers<[1], [0], [0], [1], [0, 0, 1, 1], [], []>} : vector<4x72xf32>, vector<72x256xf32>, vector<4x256xf32> -> vector<4x256xf32>
    %166 = tpu.concatenate %42, %83, %124, %165 in 0 : vector<4x256xf32>, vector<4x256xf32>, vector<4x256xf32>, vector<4x256xf32> -> vector<16x256xf32>
    %c0_52 = arith.constant 0 : index
    %c0_53 = arith.constant 0 : index
    %167 = vector.load %arg4[%c0_52, %c0_53] : memref<16x1xf32, #tpu.memory_space<vmem>>, vector<16x1xf32>
    %168 = vector.broadcast %167 : vector<16x1xf32> to vector<16x256xf32>
    %169 = arith.addf %166, %168 : vector<16x256xf32>
    %c0_54 = arith.constant 0 : index
    %c0_55 = arith.constant 0 : index
    %170 = vector.load %arg5[%c0_54, %c0_55] : memref<4x16xf32, #tpu.memory_space<vmem>>, vector<4x16xf32>
    %cst_56 = arith.constant dense<0.000000e+00> : vector<4x256xf32>
    %171 = tpu.matmul %170, %169, %cst_56 {dimension_numbers = #tpu.dot_dimension_numbers<[1], [0], [0], [1], [0, 0, 1, 1], [], []>} : vector<4x16xf32>, vector<16x256xf32>, vector<4x256xf32> -> vector<4x256xf32>
    %c0_57 = arith.constant 0 : index
    %c0_58 = arith.constant 0 : index
    %172 = vector.load %arg6[%c0_57, %c0_58] : memref<4x1xf32, #tpu.memory_space<vmem>>, vector<4x1xf32>
    %173 = vector.broadcast %172 : vector<4x1xf32> to vector<4x256xf32>
    %174 = arith.addf %171, %173 : vector<4x256xf32>
    %c0_59 = arith.constant 0 : index
    %c0_60 = arith.constant 0 : index
    %175 = vector.load %arg7[%c0_59, %c0_60] : memref<4x1xf32, #tpu.memory_space<vmem>>, vector<4x1xf32>
    %176 = vector.broadcast %175 : vector<4x1xf32> to vector<4x256xf32>
    %177 = arith.mulf %174, %176 : vector<4x256xf32>
    %c0_61 = arith.constant 0 : index
    %c0_62 = arith.constant 0 : index
    %178 = vector.load %arg8[%c0_61, %c0_62] : memref<4x1xf32, #tpu.memory_space<vmem>>, vector<4x1xf32>
    %179 = vector.broadcast %178 : vector<4x1xf32> to vector<4x256xf32>
    %180 = arith.addf %177, %179 : vector<4x256xf32>
    %cst_63 = arith.constant 0.000000e+00 : f32
    %181 = vector.broadcast %cst_63 : f32 to vector<4x256xf32>
    %182 = arith.maximumf %180, %181 : vector<4x256xf32>
    %183 = vector.extract_strided_slice %1 {offsets = [0, 0], sizes = [4, 256], strides = [1, 1]} : vector<8x256xf32> to vector<4x256xf32>
    %184 = vector.extract_strided_slice %1 {offsets = [4, 0], sizes = [4, 256], strides = [1, 1]} : vector<8x256xf32> to vector<4x256xf32>
    %cst_64 = arith.constant dense<0.000000e+00> : vector<4xf32>
    %185 = vector.multi_reduction <add>, %182, %cst_64 [1] : vector<4x256xf32> to vector<4xf32>
    %186 = vector.shape_cast %185 : vector<4xf32> to vector<4x1xf32>
    %cst_65 = arith.constant 2.560000e+02 : f32
    %187 = vector.broadcast %cst_65 : f32 to vector<4x1xf32>
    %188 = arith.divf %186, %187 : vector<4x1xf32>
    %189 = vector.broadcast %188 : vector<4x1xf32> to vector<4x256xf32>
    %190 = arith.subf %182, %189 : vector<4x256xf32>
    %191 = arith.mulf %190, %190 : vector<4x256xf32>
    %cst_66 = arith.constant dense<0.000000e+00> : vector<4xf32>
    %192 = vector.multi_reduction <add>, %191, %cst_66 [1] : vector<4x256xf32> to vector<4xf32>
    %193 = vector.shape_cast %192 : vector<4xf32> to vector<4x1xf32>
    %cst_67 = arith.constant 2.550000e+02 : f32
    %194 = vector.broadcast %cst_67 : f32 to vector<4x1xf32>
    %195 = arith.divf %193, %194 : vector<4x1xf32>
    %cst_68 = arith.constant 9.99999974E-5 : f32
    %196 = vector.broadcast %cst_68 : f32 to vector<4x1xf32>
    %197 = arith.addf %195, %196 : vector<4x1xf32>
    %cst_69 = arith.constant 4.000000e+00 : f32
    %198 = vector.broadcast %cst_69 : f32 to vector<4x1xf32>
    %199 = arith.mulf %198, %197 : vector<4x1xf32>
    %200 = tpu.reciprocal %199 : vector<4x1xf32> -> vector<4x1xf32>
    %201 = vector.broadcast %200 : vector<4x1xf32> to vector<4x256xf32>
    %202 = arith.mulf %191, %201 : vector<4x256xf32>
    %cst_70 = arith.constant 5.000000e-01 : f32
    %203 = vector.broadcast %cst_70 : f32 to vector<4x256xf32>
    %204 = arith.addf %202, %203 : vector<4x256xf32>
    %cst_71 = arith.constant 0.000000e+00 : f32
    %205 = vector.broadcast %cst_71 : f32 to vector<4x256xf32>
    %206 = arith.subf %205, %204 : vector<4x256xf32>
    %207 = math.exp %206 : vector<4x256xf32>
    %cst_72 = arith.constant 1.000000e+00 : f32
    %208 = vector.broadcast %cst_72 : f32 to vector<4x256xf32>
    %209 = arith.addf %208, %207 : vector<4x256xf32>
    %210 = tpu.reciprocal %209 : vector<4x256xf32> -> vector<4x256xf32>
    %211 = arith.mulf %182, %210 : vector<4x256xf32>
    %212 = arith.addf %211, %183 : vector<4x256xf32>
    %213 = arith.addf %212, %184 : vector<4x256xf32>
    %cst_73 = arith.constant dense<0.000000e+00> : vector<4xf32>
    %214 = vector.multi_reduction <add>, %184, %cst_73 [1] : vector<4x256xf32> to vector<4xf32>
    %215 = vector.shape_cast %214 : vector<4xf32> to vector<4x1xf32>
    %cst_74 = arith.constant 2.560000e+02 : f32
    %216 = vector.broadcast %cst_74 : f32 to vector<4x1xf32>
    %217 = arith.divf %215, %216 : vector<4x1xf32>
    %218 = vector.broadcast %217 : vector<4x1xf32> to vector<4x256xf32>
    %219 = arith.subf %184, %218 : vector<4x256xf32>
    %220 = arith.mulf %219, %219 : vector<4x256xf32>
    %cst_75 = arith.constant dense<0.000000e+00> : vector<4xf32>
    %221 = vector.multi_reduction <add>, %220, %cst_75 [1] : vector<4x256xf32> to vector<4xf32>
    %222 = vector.shape_cast %221 : vector<4xf32> to vector<4x1xf32>
    %cst_76 = arith.constant 2.550000e+02 : f32
    %223 = vector.broadcast %cst_76 : f32 to vector<4x1xf32>
    %224 = arith.divf %222, %223 : vector<4x1xf32>
    %cst_77 = arith.constant 9.99999974E-5 : f32
    %225 = vector.broadcast %cst_77 : f32 to vector<4x1xf32>
    %226 = arith.addf %224, %225 : vector<4x1xf32>
    %cst_78 = arith.constant 4.000000e+00 : f32
    %227 = vector.broadcast %cst_78 : f32 to vector<4x1xf32>
    %228 = arith.mulf %227, %226 : vector<4x1xf32>
    %229 = tpu.reciprocal %228 : vector<4x1xf32> -> vector<4x1xf32>
    %230 = vector.broadcast %229 : vector<4x1xf32> to vector<4x256xf32>
    %231 = arith.mulf %220, %230 : vector<4x256xf32>
    %cst_79 = arith.constant 5.000000e-01 : f32
    %232 = vector.broadcast %cst_79 : f32 to vector<4x256xf32>
    %233 = arith.addf %231, %232 : vector<4x256xf32>
    %cst_80 = arith.constant 0.000000e+00 : f32
    %234 = vector.broadcast %cst_80 : f32 to vector<4x256xf32>
    %235 = arith.subf %234, %233 : vector<4x256xf32>
    %236 = math.exp %235 : vector<4x256xf32>
    %cst_81 = arith.constant 1.000000e+00 : f32
    %237 = vector.broadcast %cst_81 : f32 to vector<4x256xf32>
    %238 = arith.addf %237, %236 : vector<4x256xf32>
    %239 = tpu.reciprocal %238 : vector<4x256xf32> -> vector<4x256xf32>
    %240 = arith.mulf %184, %239 : vector<4x256xf32>
    %241 = arith.mulf %240, %182 : vector<4x256xf32>
    %242 = arith.addf %213, %241 : vector<4x256xf32>
    %cst_82 = arith.constant dense<0.000000e+00> : vector<4xf32>
    %243 = vector.multi_reduction <add>, %183, %cst_82 [1] : vector<4x256xf32> to vector<4xf32>
    %244 = vector.shape_cast %243 : vector<4xf32> to vector<4x1xf32>
    %cst_83 = arith.constant 2.560000e+02 : f32
    %245 = vector.broadcast %cst_83 : f32 to vector<4x1xf32>
    %246 = arith.divf %244, %245 : vector<4x1xf32>
    %247 = vector.broadcast %246 : vector<4x1xf32> to vector<4x256xf32>
    %248 = arith.subf %183, %247 : vector<4x256xf32>
    %249 = arith.mulf %248, %248 : vector<4x256xf32>
    %cst_84 = arith.constant dense<0.000000e+00> : vector<4xf32>
    %250 = vector.multi_reduction <add>, %249, %cst_84 [1] : vector<4x256xf32> to vector<4xf32>
    %251 = vector.shape_cast %250 : vector<4xf32> to vector<4x1xf32>
    %cst_85 = arith.constant 2.550000e+02 : f32
    %252 = vector.broadcast %cst_85 : f32 to vector<4x1xf32>
    %253 = arith.divf %251, %252 : vector<4x1xf32>
    %cst_86 = arith.constant 9.99999974E-5 : f32
    %254 = vector.broadcast %cst_86 : f32 to vector<4x1xf32>
    %255 = arith.addf %253, %254 : vector<4x1xf32>
    %cst_87 = arith.constant 4.000000e+00 : f32
    %256 = vector.broadcast %cst_87 : f32 to vector<4x1xf32>
    %257 = arith.mulf %256, %255 : vector<4x1xf32>
    %258 = tpu.reciprocal %257 : vector<4x1xf32> -> vector<4x1xf32>
    %259 = vector.broadcast %258 : vector<4x1xf32> to vector<4x256xf32>
    %260 = arith.mulf %249, %259 : vector<4x256xf32>
    %cst_88 = arith.constant 5.000000e-01 : f32
    %261 = vector.broadcast %cst_88 : f32 to vector<4x256xf32>
    %262 = arith.addf %260, %261 : vector<4x256xf32>
    %cst_89 = arith.constant 0.000000e+00 : f32
    %263 = vector.broadcast %cst_89 : f32 to vector<4x256xf32>
    %264 = arith.subf %263, %262 : vector<4x256xf32>
    %265 = math.exp %264 : vector<4x256xf32>
    %cst_90 = arith.constant 1.000000e+00 : f32
    %266 = vector.broadcast %cst_90 : f32 to vector<4x256xf32>
    %267 = arith.addf %266, %265 : vector<4x256xf32>
    %268 = tpu.reciprocal %267 : vector<4x256xf32> -> vector<4x256xf32>
    %269 = arith.mulf %183, %268 : vector<4x256xf32>
    %270 = arith.mulf %269, %182 : vector<4x256xf32>
    %271 = arith.addf %242, %270 : vector<4x256xf32>
    %cst_91 = arith.constant 0.000000e+00 : f32
    %272 = vector.broadcast %cst_91 : f32 to vector<4x17xf32>
    %273 = vector.extract_strided_slice %271 {offsets = [0, 0], sizes = [4, 239], strides = [1, 1]} : vector<4x256xf32> to vector<4x239xf32>
    %274 = tpu.concatenate %272, %273 in 1 : vector<4x17xf32>, vector<4x239xf32> -> vector<4x256xf32>
    %275 = vector.broadcast %5 : vector<1x256xf32> to vector<4x256xf32>
    %276 = arith.mulf %274, %275 : vector<4x256xf32>
    %cst_92 = arith.constant 0.000000e+00 : f32
    %277 = vector.broadcast %cst_92 : f32 to vector<4x16xf32>
    %278 = vector.extract_strided_slice %271 {offsets = [0, 0], sizes = [4, 240], strides = [1, 1]} : vector<4x256xf32> to vector<4x240xf32>
    %279 = tpu.concatenate %277, %278 in 1 : vector<4x16xf32>, vector<4x240xf32> -> vector<4x256xf32>
    %cst_93 = arith.constant 0.000000e+00 : f32
    %280 = vector.broadcast %cst_93 : f32 to vector<4x15xf32>
    %281 = vector.extract_strided_slice %271 {offsets = [0, 0], sizes = [4, 241], strides = [1, 1]} : vector<4x256xf32> to vector<4x241xf32>
    %282 = tpu.concatenate %280, %281 in 1 : vector<4x15xf32>, vector<4x241xf32> -> vector<4x256xf32>
    %283 = vector.broadcast %14 : vector<1x256xf32> to vector<4x256xf32>
    %284 = arith.mulf %282, %283 : vector<4x256xf32>
    %cst_94 = arith.constant 0.000000e+00 : f32
    %285 = vector.broadcast %cst_94 : f32 to vector<4x1xf32>
    %286 = vector.extract_strided_slice %271 {offsets = [0, 0], sizes = [4, 255], strides = [1, 1]} : vector<4x256xf32> to vector<4x255xf32>
    %287 = tpu.concatenate %285, %286 in 1 : vector<4x1xf32>, vector<4x255xf32> -> vector<4x256xf32>
    %288 = vector.broadcast %5 : vector<1x256xf32> to vector<4x256xf32>
    %289 = arith.mulf %287, %288 : vector<4x256xf32>
    %290 = vector.extract_strided_slice %271 {offsets = [0, 1], sizes = [4, 255], strides = [1, 1]} : vector<4x256xf32> to vector<4x255xf32>
    %cst_95 = arith.constant 0.000000e+00 : f32
    %291 = vector.broadcast %cst_95 : f32 to vector<4x1xf32>
    %292 = tpu.concatenate %290, %291 in 1 : vector<4x255xf32>, vector<4x1xf32> -> vector<4x256xf32>
    %293 = vector.broadcast %14 : vector<1x256xf32> to vector<4x256xf32>
    %294 = arith.mulf %292, %293 : vector<4x256xf32>
    %295 = vector.extract_strided_slice %271 {offsets = [0, 15], sizes = [4, 241], strides = [1, 1]} : vector<4x256xf32> to vector<4x241xf32>
    %cst_96 = arith.constant 0.000000e+00 : f32
    %296 = vector.broadcast %cst_96 : f32 to vector<4x15xf32>
    %297 = tpu.concatenate %295, %296 in 1 : vector<4x241xf32>, vector<4x15xf32> -> vector<4x256xf32>
    %298 = vector.broadcast %5 : vector<1x256xf32> to vector<4x256xf32>
    %299 = arith.mulf %297, %298 : vector<4x256xf32>
    %300 = vector.extract_strided_slice %271 {offsets = [0, 16], sizes = [4, 240], strides = [1, 1]} : vector<4x256xf32> to vector<4x240xf32>
    %cst_97 = arith.constant 0.000000e+00 : f32
    %301 = vector.broadcast %cst_97 : f32 to vector<4x16xf32>
    %302 = tpu.concatenate %300, %301 in 1 : vector<4x240xf32>, vector<4x16xf32> -> vector<4x256xf32>
    %303 = vector.extract_strided_slice %271 {offsets = [0, 17], sizes = [4, 239], strides = [1, 1]} : vector<4x256xf32> to vector<4x239xf32>
    %cst_98 = arith.constant 0.000000e+00 : f32
    %304 = vector.broadcast %cst_98 : f32 to vector<4x17xf32>
    %305 = tpu.concatenate %303, %304 in 1 : vector<4x239xf32>, vector<4x17xf32> -> vector<4x256xf32>
    %306 = vector.broadcast %14 : vector<1x256xf32> to vector<4x256xf32>
    %307 = arith.mulf %305, %306 : vector<4x256xf32>
    %308 = tpu.concatenate %276, %279, %284, %289, %271, %294, %299, %302, %307 in 0 : vector<4x256xf32>, vector<4x256xf32>, vector<4x256xf32>, vector<4x256xf32>, vector<4x256xf32>, vector<4x256xf32>, vector<4x256xf32>, vector<4x256xf32>, vector<4x256xf32> -> vector<36x256xf32>
    %c0_99 = arith.constant 0 : index
    %c0_100 = arith.constant 0 : index
    %309 = vector.load %arg9[%c0_99, %c0_100] : memref<4x36xf32, #tpu.memory_space<vmem>>, vector<4x36xf32>
    %cst_101 = arith.constant dense<0.000000e+00> : vector<4x256xf32>
    %310 = tpu.matmul %309, %308, %cst_101 {dimension_numbers = #tpu.dot_dimension_numbers<[1], [0], [0], [1], [0, 0, 1, 1], [], []>} : vector<4x36xf32>, vector<36x256xf32>, vector<4x256xf32> -> vector<4x256xf32>
    %c0_102 = arith.constant 0 : index
    %c0_103 = arith.constant 0 : index
    %311 = vector.load %arg10[%c0_102, %c0_103] : memref<4x1xf32, #tpu.memory_space<vmem>>, vector<4x1xf32>
    %312 = vector.broadcast %311 : vector<4x1xf32> to vector<4x256xf32>
    %313 = arith.addf %310, %312 : vector<4x256xf32>
    %c0_104 = arith.constant 0 : index
    %c0_105 = arith.constant 0 : index
    %314 = vector.load %arg11[%c0_104, %c0_105] : memref<4x1xf32, #tpu.memory_space<vmem>>, vector<4x1xf32>
    %315 = vector.broadcast %314 : vector<4x1xf32> to vector<4x256xf32>
    %316 = arith.mulf %313, %315 : vector<4x256xf32>
    %c0_106 = arith.constant 0 : index
    %c0_107 = arith.constant 0 : index
    %317 = vector.load %arg12[%c0_106, %c0_107] : memref<4x1xf32, #tpu.memory_space<vmem>>, vector<4x1xf32>
    %318 = vector.broadcast %317 : vector<4x1xf32> to vector<4x256xf32>
    %319 = arith.addf %316, %318 : vector<4x256xf32>
    %cst_108 = arith.constant 0.000000e+00 : f32
    %320 = vector.broadcast %cst_108 : f32 to vector<4x256xf32>
    %321 = arith.maximumf %319, %320 : vector<4x256xf32>
    %cst_109 = arith.constant dense<0.000000e+00> : vector<4xf32>
    %322 = vector.multi_reduction <add>, %321, %cst_109 [1] : vector<4x256xf32> to vector<4xf32>
    %323 = vector.shape_cast %322 : vector<4xf32> to vector<4x1xf32>
    %cst_110 = arith.constant 2.560000e+02 : f32
    %324 = vector.broadcast %cst_110 : f32 to vector<4x1xf32>
    %325 = arith.divf %323, %324 : vector<4x1xf32>
    %326 = vector.broadcast %325 : vector<4x1xf32> to vector<4x256xf32>
    %327 = arith.subf %321, %326 : vector<4x256xf32>
    %328 = arith.mulf %327, %327 : vector<4x256xf32>
    %cst_111 = arith.constant dense<0.000000e+00> : vector<4xf32>
    %329 = vector.multi_reduction <add>, %328, %cst_111 [1] : vector<4x256xf32> to vector<4xf32>
    %330 = vector.shape_cast %329 : vector<4xf32> to vector<4x1xf32>
    %cst_112 = arith.constant 2.550000e+02 : f32
    %331 = vector.broadcast %cst_112 : f32 to vector<4x1xf32>
    %332 = arith.divf %330, %331 : vector<4x1xf32>
    %cst_113 = arith.constant 9.99999974E-5 : f32
    %333 = vector.broadcast %cst_113 : f32 to vector<4x1xf32>
    %334 = arith.addf %332, %333 : vector<4x1xf32>
    %cst_114 = arith.constant 4.000000e+00 : f32
    %335 = vector.broadcast %cst_114 : f32 to vector<4x1xf32>
    %336 = arith.mulf %335, %334 : vector<4x1xf32>
    %337 = tpu.reciprocal %336 : vector<4x1xf32> -> vector<4x1xf32>
    %338 = vector.broadcast %337 : vector<4x1xf32> to vector<4x256xf32>
    %339 = arith.mulf %328, %338 : vector<4x256xf32>
    %cst_115 = arith.constant 5.000000e-01 : f32
    %340 = vector.broadcast %cst_115 : f32 to vector<4x256xf32>
    %341 = arith.addf %339, %340 : vector<4x256xf32>
    %cst_116 = arith.constant 0.000000e+00 : f32
    %342 = vector.broadcast %cst_116 : f32 to vector<4x256xf32>
    %343 = arith.subf %342, %341 : vector<4x256xf32>
    %344 = math.exp %343 : vector<4x256xf32>
    %cst_117 = arith.constant 1.000000e+00 : f32
    %345 = vector.broadcast %cst_117 : f32 to vector<4x256xf32>
    %346 = arith.addf %345, %344 : vector<4x256xf32>
    %347 = tpu.reciprocal %346 : vector<4x256xf32> -> vector<4x256xf32>
    %348 = arith.mulf %321, %347 : vector<4x256xf32>
    %c0_118 = arith.constant 0 : index
    %c0_119 = arith.constant 0 : index
    %c0_120 = arith.constant 0 : index
    %349 = vector.load %arg13[%c0_118, %c0_119, %c0_120] : memref<1x4x256xf32, #tpu.memory_space<vmem>>, vector<1x4x256xf32>
    %350 = vector.shape_cast %349 : vector<1x4x256xf32> to vector<4x256xf32>
    %351 = vector.shape_cast %348 : vector<4x256xf32> to vector<1x4x256xf32>
    tpu.vector_store %arg13[%c0_118, %c0_119, %c0_120], %351 {strides = array<i32>} : memref<1x4x256xf32, #tpu.memory_space<vmem>>, vector<1x4x256xf32>,
    return
  }
  func.func @transform_0(%arg0: i32) -> (i32, i32, i32) {
    %c0_i32 = arith.constant 0 : i32
    %c0_i32_0 = arith.constant 0 : i32
    %c0_i32_1 = arith.constant 0 : i32
    return %arg0, %c0_i32, %c0_i32_0 : i32, i32, i32
  }
  func.func @transform_1(%arg0: i32) -> (i32, i32) {
    %c0_i32 = arith.constant 0 : i32
    %c0_i32_0 = arith.constant 0 : i32
    %c0_i32_1 = arith.constant 0 : i32
    return %c0_i32, %c0_i32_0 : i32, i32
  }
  func.func @transform_2(%arg0: i32) -> (i32, i32) {
    %c0_i32 = arith.constant 0 : i32
    %c0_i32_0 = arith.constant 0 : i32
    %c0_i32_1 = arith.constant 0 : i32
    return %c0_i32, %c0_i32_0 : i32, i32
  }
  func.func @transform_3(%arg0: i32) -> (i32, i32) {
    %c0_i32 = arith.constant 0 : i32
    %c0_i32_0 = arith.constant 0 : i32
    %c0_i32_1 = arith.constant 0 : i32
    return %c0_i32, %c0_i32_0 : i32, i32
  }
  func.func @transform_4(%arg0: i32) -> (i32, i32) {
    %c0_i32 = arith.constant 0 : i32
    %c0_i32_0 = arith.constant 0 : i32
    %c0_i32_1 = arith.constant 0 : i32
    return %c0_i32, %c0_i32_0 : i32, i32
  }
  func.func @transform_5(%arg0: i32) -> (i32, i32) {
    %c0_i32 = arith.constant 0 : i32
    %c0_i32_0 = arith.constant 0 : i32
    %c0_i32_1 = arith.constant 0 : i32
    return %c0_i32, %c0_i32_0 : i32, i32
  }
  func.func @transform_6(%arg0: i32) -> (i32, i32) {
    %c0_i32 = arith.constant 0 : i32
    %c0_i32_0 = arith.constant 0 : i32
    %c0_i32_1 = arith.constant 0 : i32
    return %c0_i32, %c0_i32_0 : i32, i32
  }
  func.func @transform_7(%arg0: i32) -> (i32, i32) {
    %c0_i32 = arith.constant 0 : i32
    %c0_i32_0 = arith.constant 0 : i32
    %c0_i32_1 = arith.constant 0 : i32
    return %c0_i32, %c0_i32_0 : i32, i32
  }
  func.func @transform_8(%arg0: i32) -> (i32, i32) {
    %c0_i32 = arith.constant 0 : i32
    %c0_i32_0 = arith.constant 0 : i32
    %c0_i32_1 = arith.constant 0 : i32
    return %c0_i32, %c0_i32_0 : i32, i32
  }
  func.func @transform_9(%arg0: i32) -> (i32, i32) {
    %c0_i32 = arith.constant 0 : i32
    %c0_i32_0 = arith.constant 0 : i32
    %c0_i32_1 = arith.constant 0 : i32
    return %c0_i32, %c0_i32_0 : i32, i32
  }
  func.func @transform_10(%arg0: i32) -> (i32, i32) {
    %c0_i32 = arith.constant 0 : i32
    %c0_i32_0 = arith.constant 0 : i32
    %c0_i32_1 = arith.constant 0 : i32
    return %c0_i32, %c0_i32_0 : i32, i32
  }
  func.func @transform_11(%arg0: i32) -> (i32, i32) {
    %c0_i32 = arith.constant 0 : i32
    %c0_i32_0 = arith.constant 0 : i32
    %c0_i32_1 = arith.constant 0 : i32
    return %c0_i32, %c0_i32_0 : i32, i32
  }
  func.func @transform_12(%arg0: i32) -> (i32, i32, i32) {
    %c0_i32 = arith.constant 0 : i32
    %c0_i32_0 = arith.constant 0 : i32
    %c0_i32_1 = arith.constant 0 : i32
    return %arg0, %c0_i32, %c0_i32_0 : i32, i32, i32
  }
}

</mosaic_0001>

<llo_original>
// kernel: bfam_forward.1
$region0: #{bfam_forward.1}
  #allocation0 [shape = 'u32[]', space=smem, size = 0x4, offset = 0x4, fixed_abs, tag = 'smem constant byte address 0x4 - core index']
  #allocation1 [shape = 'u32[144,128]{1,0:T(1,128)}', space=vmem, size = 0x12000, scoped, tag = 'internal scratch']
  %s0 = inlined_call_operand.vmem [shape: f32[2,8,256], index: 0, kind: input, shape index: {}]
  %s1 = inlined_call_operand.vmem [shape: f32[9,256], index: 1, kind: input, shape index: {}]
  %s2 = inlined_call_operand.vmem [shape: f32[16,72], index: 2, kind: input, shape index: {}]
  %s3 = inlined_call_operand.vmem [shape: f32[16,1], index: 3, kind: input, shape index: {}]
  %s4 = inlined_call_operand.vmem [shape: f32[4,16], index: 4, kind: input, shape index: {}]
  %s5 = inlined_call_operand.vmem [shape: f32[4,1], index: 5, kind: input, shape index: {}]
  %s6 = inlined_call_operand.vmem [shape: f32[4,1], index: 6, kind: input, shape index: {}]
  %s7 = inlined_call_operand.vmem [shape: f32[4,1], index: 7, kind: input, shape index: {}]
  %s8 = inlined_call_operand.vmem [shape: f32[4,36], index: 8, kind: input, shape index: {}]
  %s9 = inlined_call_operand.vmem [shape: f32[4,1], index: 9, kind: input, shape index: {}]
  %s10 = inlined_call_operand.vmem [shape: f32[4,1], index: 10, kind: input, shape index: {}]
  %s11 = inlined_call_operand.vmem [shape: f32[4,1], index: 11, kind: input, shape index: {}]
  %s12 = inlined_call_operand.vmem [shape: f32[2,4,256], index: 12, kind: output, shape index: {}]
  %s13 = sld [smem:[#allocation0]]
  $region81: #{bfam_forward.1} parent=0
    _
  %s15 = ssub.s32 1, %s13
  %s16 = scalar_select 0, %s15, %s13
  loop: start=0, step=1, limit=4
  $region2: #{bfam_forward.1} parent=0 // loop_pre_header
    _
  $region3: #{bfam_forward.1} parent=0 // loop_header
    %s18 = sphi 0, %s22
    %p19 = scmp.ge.s32.totalorder %s18, 4
    %s28 = sphi 0, %s30
    %s31 = sphi 0, %s28
    %s32 = sphi 0, %s31
    %s48 = sphi 0, %s32
    %s52 = sphi 0, %s52
    %s54 = sphi 0, %s52
    %s55 = sphi 0, %s54
    %s69 = sphi 0, %s55
    %s73 = sphi 0, %s73
    %s75 = sphi 0, %s73
    %s76 = sphi 0, %s75
    %s90 = sphi 0, %s76
    %s94 = sphi 0, %s94
    %s96 = sphi 0, %s94
    %s97 = sphi 0, %s96
    %s111 = sphi 0, %s97
    %s115 = sphi 0, %s115
    %s117 = sphi 0, %s115
    %s118 = sphi 0, %s117
    %s132 = sphi 0, %s118
    %s136 = sphi 0, %s136
    %s138 = sphi 0, %s136
    %s139 = sphi 0, %s138
    %s153 = sphi 0, %s139
    %s157 = sphi 0, %s157
    %s159 = sphi 0, %s157
    %s160 = sphi 0, %s159
    %s174 = sphi 0, %s160
    %s178 = sphi 0, %s178
    %s180 = sphi 0, %s178
    %s181 = sphi 0, %s180
    %s195 = sphi 0, %s181
    %s199 = sphi 0, %s199
    %s201 = sphi 0, %s199
    %s202 = sphi 0, %s201
    %s216 = sphi 0, %s202
    %s220 = sphi 0, %s220
    %s222 = sphi 0, %s220
    %s223 = sphi 0, %s222
    %s237 = sphi 0, %s223
    %s241 = sphi 0, %s241
    %s243 = sphi 0, %s241
    %s244 = sphi 0, %s243
    %s258 = sphi 0, %s244
    %s262 = sphi 0, %s262
    %s264 = sphi 0, %s262
    %s265 = sphi 0, %s264
    %s279 = sphi 0, %s265
    %s285 = sphi 0, %s287
    %s288 = sphi 0, %s285
    %s289 = sphi 0, %s288
    %s305 = sphi 0, %s289
  $region4: #{bfam_forward.1} parent=0 // loop_header_branch
    %21 = sbr.rel (%p19) target = $region8
  $region5: #{bfam_forward.1} parent=0 // loop_body
    %s23 = ssub.s32 %s18, 1
    %s24 = ssub.s32 %s18, 2
    %s25 = sadd.s32 %s18, 1
    %s26 = ssub.s32 %s18, %s25
    %p27 = scmp.eq.s32.totalorder %s26, 0
    %s29 = sadd.s32 %s28, 1
    %s30 = scalar_select %p27, %s28, %s29
    %p33 = pneg %p27
    %p34 = scmp.eq.s32.totalorder %s18, 1
    %p35 = por %p33, %p34
    %p36 = scmp.ne.s32.totalorder %s28, %s31
    %p37 = scmp.eq.s32.totalorder %s18, 0
    %p38 = por %p36, %p37
    %p39 = scmp.ne.s32.totalorder %s28, %s31
    %p40 = scmp.eq.s32.totalorder %s23, 1
    %p41 = por %p39, %p40
    %p42 = scmp.ne.s32.totalorder %s31, %s32
    %p43 = scmp.eq.s32.totalorder %s23, 0
    %p44 = por %p42, %p43
    %p45 = scmp.ne.s32.totalorder %s31, %s32
    %p46 = scmp.eq.s32.totalorder %s24, 1
    %p47 = por %p45, %p46
    %p49 = scmp.ne.s32.totalorder %s32, %s48
    %p50 = scmp.eq.s32.totalorder %s24, 0
    %p51 = por %p49, %p50
    %s53 = sadd.s32 %s52, 1
    %p56 = scmp.eq.s32.totalorder %s18, 1
    %p57 = scmp.ne.s32.totalorder %s52, %s54
    %p58 = scmp.eq.s32.totalorder %s18, 0
    %p59 = por %p57, %p58
    %p60 = scmp.ne.s32.totalorder %s52, %s54
    %p61 = scmp.eq.s32.totalorder %s23, 1
    %p62 = por %p60, %p61
    %p63 = scmp.ne.s32.totalorder %s54, %s55
    %p64 = scmp.eq.s32.totalorder %s23, 0
    %p65 = por %p63, %p64
    %p66 = scmp.ne.s32.totalorder %s54, %s55
    %p67 = scmp.eq.s32.totalorder %s24, 1
    %p68 = por %p66, %p67
    %p70 = scmp.ne.s32.totalorder %s55, %s69
    %p71 = scmp.eq.s32.totalorder %s24, 0
    %p72 = por %p70, %p71
    %s74 = sadd.s32 %s73, 1
    %p77 = scmp.eq.s32.totalorder %s18, 1
    %p78 = scmp.ne.s32.totalorder %s73, %s75
    %p79 = scmp.eq.s32.totalorder %s18, 0
    %p80 = por %p78, %p79
    %p81 = scmp.ne.s32.totalorder %s73, %s75
    %p82 = scmp.eq.s32.totalorder %s23, 1
    %p83 = por %p81, %p82
    %p84 = scmp.ne.s32.totalorder %s75, %s76
    %p85 = scmp.eq.s32.totalorder %s23, 0
    %p86 = por %p84, %p85
    %p87 = scmp.ne.s32.totalorder %s75, %s76
    %p88 = scmp.eq.s32.totalorder %s24, 1
    %p89 = por %p87, %p88
    %p91 = scmp.ne.s32.totalorder %s76, %s90
    %p92 = scmp.eq.s32.totalorder %s24, 0
    %p93 = por %p91, %p92
    %s95 = sadd.s32 %s94, 1
    %p98 = scmp.eq.s32.totalorder %s18, 1
    %p99 = scmp.ne.s32.totalorder %s94, %s96
    %p100 = scmp.eq.s32.totalorder %s18, 0
    %p101 = por %p99, %p100
    %p102 = scmp.ne.s32.totalorder %s94, %s96
    %p103 = scmp.eq.s32.totalorder %s23, 1
    %p104 = por %p102, %p103
    %p105 = scmp.ne.s32.totalorder %s96, %s97
    %p106 = scmp.eq.s32.totalorder %s23, 0
    %p107 = por %p105, %p106
    %p108 = scmp.ne.s32.totalorder %s96, %s97
    %p109 = scmp.eq.s32.totalorder %s24, 1
    %p110 = por %p108, %p109
    %p112 = scmp.ne.s32.totalorder %s97, %s111
    %p113 = scmp.eq.s32.totalorder %s24, 0
    %p114 = por %p112, %p113
    %s116 = sadd.s32 %s115, 1
    %p119 = scmp.eq.s32.totalorder %s18, 1
    %p120 = scmp.ne.s32.totalorder %s115, %s117
    %p121 = scmp.eq.s32.totalorder %s18, 0
    %p122 = por %p120, %p121
    %p123 = scmp.ne.s32.totalorder %s115, %s117
    %p124 = scmp.eq.s32.totalorder %s23, 1
    %p125 = por %p123, %p124
    %p126 = scmp.ne.s32.totalorder %s117, %s118
    %p127 = scmp.eq.s32.totalorder %s23, 0
    %p128 = por %p126, %p127
    %p129 = scmp.ne.s32.totalorder %s117, %s118
    %p130 = scmp.eq.s32.totalorder %s24, 1
    %p131 = por %p129, %p130
    %p133 = scmp.ne.s32.totalorder %s118, %s132
    %p134 = scmp.eq.s32.totalorder %s24, 0
    %p135 = por %p133, %p134
    %s137 = sadd.s32 %s136, 1
    %p140 = scmp.eq.s32.totalorder %s18, 1
    %p141 = scmp.ne.s32.totalorder %s136, %s138
    %p142 = scmp.eq.s32.totalorder %s18, 0
    %p143 = por %p141, %p142
    %p144 = scmp.ne.s32.totalorder %s136, %s138
    %p145 = scmp.eq.s32.totalorder %s23, 1
    %p146 = por %p144, %p145
    %p147 = scmp.ne.s32.totalorder %s138, %s139
    %p148 = scmp.eq.s32.totalorder %s23, 0
    %p149 = por %p147, %p148
    %p150 = scmp.ne.s32.totalorder %s138, %s139
    %p151 = scmp.eq.s32.totalorder %s24, 1
    %p152 = por %p150, %p151
    %p154 = scmp.ne.s32.totalorder %s139, %s153
    %p155 = scmp.eq.s32.totalorder %s24, 0
    %p156 = por %p154, %p155
    %s158 = sadd.s32 %s157, 1
    %p161 = scmp.eq.s32.totalorder %s18, 1
    %p162 = scmp.ne.s32.totalorder %s157, %s159
    %p163 = scmp.eq.s32.totalorder %s18, 0
    %p164 = por %p162, %p163
    %p165 = scmp.ne.s32.totalorder %s157, %s159
    %p166 = scmp.eq.s32.totalorder %s23, 1
    %p167 = por %p165, %p166
    %p168 = scmp.ne.s32.totalorder %s159, %s160
    %p169 = scmp.eq.s32.totalorder %s23, 0
    %p170 = por %p168, %p169
    %p171 = scmp.ne.s32.totalorder %s159, %s160
    %p172 = scmp.eq.s32.totalorder %s24, 1
    %p173 = por %p171, %p172
    %p175 = scmp.ne.s32.totalorder %s160, %s174
    %p176 = scmp.eq.s32.totalorder %s24, 0
    %p177 = por %p175, %p176
    %s179 = sadd.s32 %s178, 1
    %p182 = scmp.eq.s32.totalorder %s18, 1
    %p183 = scmp.ne.s32.totalorder %s178, %s180
    %p184 = scmp.eq.s32.totalorder %s18, 0
    %p185 = por %p183, %p184
    %p186 = scmp.ne.s32.totalorder %s178, %s180
    %p187 = scmp.eq.s32.totalorder %s23, 1
    %p188 = por %p186, %p187
    %p189 = scmp.ne.s32.totalorder %s180, %s181
    %p190 = scmp.eq.s32.totalorder %s23, 0
    %p191 = por %p189, %p190
    %p192 = scmp.ne.s32.totalorder %s180, %s181
    %p193 = scmp.eq.s32.totalorder %s24, 1
    %p194 = por %p192, %p193
    %p196 = scmp.ne.s32.totalorder %s181, %s195
    %p197 = scmp.eq.s32.totalorder %s24, 0
    %p198 = por %p196, %p197
    %s200 = sadd.s32 %s199, 1
    %p203 = scmp.eq.s32.totalorder %s18, 1
    %p204 = scmp.ne.s32.totalorder %s199, %s201
    %p205 = scmp.eq.s32.totalorder %s18, 0
    %p206 = por %p204, %p205
    %p207 = scmp.ne.s32.totalorder %s199, %s201
    %p208 = scmp.eq.s32.totalorder %s23, 1
    %p209 = por %p207, %p208
    %p210 = scmp.ne.s32.totalorder %s201, %s202
    %p211 = scmp.eq.s32.totalorder %s23, 0
    %p212 = por %p210, %p211
    %p213 = scmp.ne.s32.totalorder %s201, %s202
    %p214 = scmp.eq.s32.totalorder %s24, 1
    %p215 = por %p213, %p214
    %p217 = scmp.ne.s32.totalorder %s202, %s216
    %p218 = scmp.eq.s32.totalorder %s24, 0
    %p219 = por %p217, %p218
    %s221 = sadd.s32 %s220, 1
    %p224 = scmp.eq.s32.totalorder %s18, 1
    %p225 = scmp.ne.s32.totalorder %s220, %s222
    %p226 = scmp.eq.s32.totalorder %s18, 0
    %p227 = por %p225, %p226
    %p228 = scmp.ne.s32.totalorder %s220, %s222
    %p229 = scmp.eq.s32.totalorder %s23, 1
    %p230 = por %p228, %p229
    %p231 = scmp.ne.s32.totalorder %s222, %s223
    %p232 = scmp.eq.s32.totalorder %s23, 0
    %p233 = por %p231, %p232
    %p234 = scmp.ne.s32.totalorder %s222, %s223
    %p235 = scmp.eq.s32.totalorder %s24, 1
    %p236 = por %p234, %p235
    %p238 = scmp.ne.s32.totalorder %s223, %s237
    %p239 = scmp.eq.s32.totalorder %s24, 0
    %p240 = por %p238, %p239
    %s242 = sadd.s32 %s241, 1
    %p245 = scmp.eq.s32.totalorder %s18, 1
    %p246 = scmp.ne.s32.totalorder %s241, %s243
    %p247 = scmp.eq.s32.totalorder %s18, 0
    %p248 = por %p246, %p247
    %p249 = scmp.ne.s32.totalorder %s241, %s243
    %p250 = scmp.eq.s32.totalorder %s23, 1
    %p251 = por %p249, %p250
    %p252 = scmp.ne.s32.totalorder %s243, %s244
    %p253 = scmp.eq.s32.totalorder %s23, 0
    %p254 = por %p252, %p253
    %p255 = scmp.ne.s32.totalorder %s243, %s244
    %p256 = scmp.eq.s32.totalorder %s24, 1
    %p257 = por %p255, %p256
    %p259 = scmp.ne.s32.totalorder %s244, %s258
    %p260 = scmp.eq.s32.totalorder %s24, 0
    %p261 = por %p259, %p260
    %s263 = sadd.s32 %s262, 1
    %p266 = scmp.eq.s32.totalorder %s18, 1
    %p267 = scmp.ne.s32.totalorder %s262, %s264
    %p268 = scmp.eq.s32.totalorder %s18, 0
    %p269 = por %p267, %p268
    %p270 = scmp.ne.s32.totalorder %s262, %s264
    %p271 = scmp.eq.s32.totalorder %s23, 1
    %p272 = por %p270, %p271
    %p273 = scmp.ne.s32.totalorder %s264, %s265
    %p274 = scmp.eq.s32.totalorder %s23, 0
    %p275 = por %p273, %p274
    %p276 = scmp.ne.s32.totalorder %s264, %s265
    %p277 = scmp.eq.s32.totalorder %s24, 1
    %p278 = por %p276, %p277
    %p280 = scmp.ne.s32.totalorder %s265, %s279
    %p281 = scmp.eq.s32.totalorder %s24, 0
    %p282 = por %p280, %p281
    %s283 = ssub.s32 %s18, %s25
    %p284 = scmp.eq.s32.totalorder %s283, 0
    %s286 = sadd.s32 %s285, 1
    %s287 = scalar_select %p284, %s285, %s286
    %p290 = pneg %p284
    %p291 = scmp.eq.s32.totalorder %s18, 1
    %p292 = por %p290, %p291
    %p293 = scmp.ne.s32.totalorder %s285, %s288
    %p294 = scmp.eq.s32.totalorder %s18, 0
    %p295 = por %p293, %p294
    %p296 = scmp.ne.s32.totalorder %s285, %s288
    %p297 = scmp.eq.s32.totalorder %s23, 1
    %p298 = por %p296, %p297
    %p299 = scmp.ne.s32.totalorder %s288, %s289
    %p300 = scmp.eq.s32.totalorder %s23, 0
    %p301 = por %p299, %p300
    %p302 = scmp.ne.s32.totalorder %s288, %s289
    %p303 = scmp.eq.s32.totalorder %s24, 1
    %p304 = por %p302, %p303
    %p306 = scmp.ne.s32.totalorder %s289, %s305
    %p307 = scmp.eq.s32.totalorder %s24, 0
    %p308 = por %p306, %p307
    %p309 = scmp.le.s32.totalorder 1, %s18
    %p310 = scmp.lt.s32.totalorder %s18, 3
    %p311 = pnand %p309, %p310
    %p312 = pneg %p311
    // Predicated region
    $region9: #{bfam_forward.1} parent=5 // pred_check
      _
    $region10: #{bfam_forward.1} parent=5 // pred_check_branch
      %314 = sbr.rel (%p311) target = $region12
    $region11: #{bfam_forward.1} parent=5 // pred_region
      %s315 = ssub.s32 %s18, 1
      // Predicated region
      $region13: #{bfam_forward.1} parent=11 // pred_check
        %p316 = pneg %p65
      $region14: #{bfam_forward.1} parent=11 // pred_check_branch
        %318 = sbr.rel (%p316) target = $region16
      $region15: #{bfam_forward.1} parent=11 // pred_region
        _
      $region16: #{bfam_forward.1} parent=11 // pred_fallthru
        _
      // Predicated region
      $region17: #{bfam_forward.1} parent=11 // pred_check
        %p319 = pneg %p86
      $region18: #{bfam_forward.1} parent=11 // pred_check_branch
        %321 = sbr.rel (%p319) target = $region20
      $region19: #{bfam_forward.1} parent=11 // pred_region
        _
      $region20: #{bfam_forward.1} parent=11 // pred_fallthru
        _
      // Predicated region
      $region21: #{bfam_forward.1} parent=11 // pred_check
        %p322 = pneg %p107
      $region22: #{bfam_forward.1} parent=11 // pred_check_branch
        %324 = sbr.rel (%p322) target = $region24
      $region23: #{bfam_forward.1} parent=11 // pred_region
        _
      $region24: #{bfam_forward.1} parent=11 // pred_fallthru
        _
      // Predicated region
      $region25: #{bfam_forward.1} parent=11 // pred_check
        %p325 = pneg %p128
      $region26: #{bfam_forward.1} parent=11 // pred_check_branch
        %327 = sbr.rel (%p325) target = $region28
      $region27: #{bfam_forward.1} parent=11 // pred_region
        _
      $region28: #{bfam_forward.1} parent=11 // pred_fallthru
        _
      // Predicated region
      $region29: #{bfam_forward.1} parent=11 // pred_check
        %p328 = pneg %p149
      $region30: #{bfam_forward.1} parent=11 // pred_check_branch
        %330 = sbr.rel (%p328) target = $region32
      $region31: #{bfam_forward.1} parent=11 // pred_region
        _
      $region32: #{bfam_forward.1} parent=11 // pred_fallthru
        _
      // Predicated region
      $region33: #{bfam_forward.1} parent=11 // pred_check
        %p331 = pneg %p170
      $region34: #{bfam_forward.1} parent=11 // pred_check_branch
        %333 = sbr.rel (%p331) target = $region36
      $region35: #{bfam_forward.1} parent=11 // pred_region
        _
      $region36: #{bfam_forward.1} parent=11 // pred_fallthru
        _
      // Predicated region
      $region37: #{bfam_forward.1} parent=11 // pred_check
        %p334 = pneg %p191
      $region38: #{bfam_forward.1} parent=11 // pred_check_branch
        %336 = sbr.rel (%p334) target = $region40
      $region39: #{bfam_forward.1} parent=11 // pred_region
        _
      $region40: #{bfam_forward.1} parent=11 // pred_fallthru
        _
      // Predicated region
      $region41: #{bfam_forward.1} parent=11 // pred_check
        %p337 = pneg %p212
      $region42: #{bfam_forward.1} parent=11 // pred_check_branch
        %339 = sbr.rel (%p337) target = $region44
      $region43: #{bfam_forward.1} parent=11 // pred_region
        _
      $region44: #{bfam_forward.1} parent=11 // pred_fallthru
        _
      // Predicated region
      $region45: #{bfam_forward.1} parent=11 // pred_check
        %p340 = pneg %p233
      $region46: #{bfam_forward.1} parent=11 // pred_check_branch
        %342 = sbr.rel (%p340) target = $region48
      $region47: #{bfam_forward.1} parent=11 // pred_region
        _
      $region48: #{bfam_forward.1} parent=11 // pred_fallthru
        _
      // Predicated region
      $region49: #{bfam_forward.1} parent=11 // pred_check
        %p343 = pneg %p254
      $region50: #{bfam_forward.1} parent=11 // pred_check_branch
        %345 = sbr.rel (%p343) target = $region52
      $region51: #{bfam_forward.1} parent=11 // pred_region
        _
      $region52: #{bfam_forward.1} parent=11 // pred_fallthru
        _
      // Predicated region
      $region53: #{bfam_forward.1} parent=11 // pred_check
        %p346 = pneg %p275
      $region54: #{bfam_forward.1} parent=11 // pred_check_branch
        %348 = sbr.rel (%p346) target = $region56
      $region55: #{bfam_forward.1} parent=11 // pred_region
        _
      $region56: #{bfam_forward.1} parent=11 // pred_fallthru
        _
    $region12: #{bfam_forward.1} parent=5 // pred_fallthru
      _
    %p349 = scmp.lt.s32.totalorder %s18, 2
    // Predicated region
    $region57: #{bfam_forward.1} parent=5 // pred_check
      %p350 = pneg %p349
    $region58: #{bfam_forward.1} parent=5 // pred_check_branch
      %352 = sbr.rel (%p350) target = $region60
    $region59: #{bfam_forward.1} parent=5 // pred_region
      // Predicated region
      $region61: #{bfam_forward.1} parent=59 // pred_check
        %p353 = pneg %p38
      $region62: #{bfam_forward.1} parent=59 // pred_check_branch
        %355 = sbr.rel (%p353) target = $region64
      $region63: #{bfam_forward.1} parent=59 // pred_region
        %p356 = scmp.lt.s32.totalorder %s18, 1
        %s357 = scalar_select %p356, %s18, 1
        %s358 = smul.addr %s357, 2
        %s359 = smul.addr %s358, 8
        %s360 = scalar_lea.vmem %s0, %s359
      $region64: #{bfam_forward.1} parent=59 // pred_fallthru
        _
    $region60: #{bfam_forward.1} parent=5 // pred_fallthru
      _
    %p361 = scmp.le.s32.totalorder 1, %s18
    %p362 = scmp.lt.s32.totalorder %s18, 3
    %p363 = pnand %p361, %p362
    %p364 = pneg %p363
    // Predicated region
    $region65: #{bfam_forward.1} parent=5 // pred_check
      _
    $region66: #{bfam_forward.1} parent=5 // pred_check_branch
      %366 = sbr.rel (%p363) target = $region68
    $region67: #{bfam_forward.1} parent=5 // pred_region
      %s367 = ssub.s32 %s18, 1
      %p368 = scmp.lt.s32.totalorder %s23, 1
      %s369 = scalar_select %p368, %s23, 1
      %s370 = smul.addr %s369, 2
      %s371 = smul.addr %s370, 8
      %s372 = scalar_lea.vmem %s0, %s371
      %p373 = pneg %p44
      %p374 = pneg %p41
      %p375 = pneg %p65
      %p376 = pneg %p62
      %p377 = pneg %p86
      %p378 = pneg %p83
      %p379 = pneg %p107
      %p380 = pneg %p104
      %p381 = pneg %p128
      %p382 = pneg %p125
      %p383 = pneg %p149
      %p384 = pneg %p146
      %p385 = pneg %p170
      %p386 = pneg %p167
      %p387 = pneg %p191
      %p388 = pneg %p188
      %p389 = pneg %p212
      %p390 = pneg %p209
      %p391 = pneg %p233
      %p392 = pneg %p230
      %p393 = pneg %p254
      %p394 = pneg %p251
      %p395 = pneg %p275
      %p396 = pneg %p272
      %p397 = pneg %p301
      %p398 = pneg %p298
      %p399 = scmp.lt.s32.totalorder %s23, 1
      %s400 = scalar_select %p399, %s23, 1
      %s401 = smul.addr %s400, 2
      %s402 = smul.addr %s401, 4
      %s403 = scalar_lea.vmem %s12, %s402
      %p404 = scmp.lt.s32.totalorder %s23, 1
      %s405 = scalar_select %p404, %s23, 1
      %s406 = smul.addr %s405, 2
      %s407 = smul.addr %s406, 8
      %s408 = scalar_lea.vmem %s0, %s407
      %p409 = scmp.lt.s32.totalorder %s23, 1
      %s410 = scalar_select %p409, %s23, 1
      %s411 = smul.addr %s410, 2
      %s412 = smul.addr %s411, 4
      %s413 = scalar_lea.vmem %s12, %s412
      %v414 = vld [vmem:[%s408] sm:$0xff]
      %v415 = vld [vmem:[%s408 + $0x8] sm:$0xff]
      %418 = vrot.lane.b32.xlu0 %v414, 17
      %v419 = vpop.permute.xlu0 %418
      %420 = vrot.lane.b32.xlu0 %v415, 17
      %v421 = vpop.permute.xlu0 %420
      %vm422 = vcmask 138240
      %v423 = vsel %vm422, %v419, %v421
      %v426 = vsel %vm422, 0.0, %v419
      %s427 = scalar_lea.vmem %s1, 3
      %v428 = vld [vmem:[%s427] ss:$8 sm:$0x3]
      %v430 = vlaneseq
      %v431 = vshrl.u32 %v430, 7
      %v432 = vsub.s32 0, %v431
      %v433 = vrot.slane %v428, %v432
      %v434 = vlaneseq
      %v435 = vshrl.u32 %v434, 7
      %v436 = vsub.s32 1, %v435
      %v437 = vrot.slane %v428, %v436
      %v440 = vmul.f32 %v426, %v433
      %v441 = vmul.f32 %v423, %v437
      %442 = vrot.lane.b32.xlu0 %v414, 16
      %v443 = vpop.permute.xlu0 %442
      %444 = vrot.lane.b32.xlu0 %v415, 16
      %v445 = vpop.permute.xlu0 %444
      %vm446 = vcmask 130048
      %v447 = vsel %vm446, %v443, %v445
      %v450 = vsel %vm446, 0.0, %v443
      %451 = vrot.lane.b32.xlu0 %v414, 15
      %v452 = vpop.permute.xlu0 %451
      %453 = vrot.lane.b32.xlu0 %v415, 15
      %v454 = vpop.permute.xlu0 %453
      %vm455 = vcmask 121856
      %v456 = vsel %vm455, %v452, %v454
      %v459 = vsel %vm455, 0.0, %v452
      %s460 = scalar_lea.vmem %s1, 5
      %v461 = vld [vmem:[%s460] ss:$8 sm:$0x3]
      %v463 = vlaneseq
      %v464 = vshrl.u32 %v463, 7
      %v465 = vsub.s32 0, %v464
      %v466 = vrot.slane %v461, %v465
      %v467 = vlaneseq
      %v468 = vshrl.u32 %v467, 7
      %v469 = vsub.s32 1, %v468
      %v470 = vrot.slane %v461, %v469
      %v473 = vmul.f32 %v459, %v466
      %v474 = vmul.f32 %v456, %v470
      %475 = vrot.lane.b32.xlu0 %v414, 1
      %v476 = vpop.permute.xlu0 %475
      %477 = vrot.lane.b32.xlu0 %v415, 1
      %v478 = vpop.permute.xlu0 %477
      %vm479 = vcmask 7168
      %v480 = vsel %vm479, %v476, %v478
      %v483 = vsel %vm479, 0.0, %v476
      %v484 = vmul.f32 %v483, %v433
      %v485 = vmul.f32 %v480, %v437
      %486 = vrot.lane.b32.xlu0 %v414, 127
      %v487 = vpop.permute.xlu0 %486
      %488 = vrot.lane.b32.xlu0 %v415, 127
      %v489 = vpop.permute.xlu0 %488
      %vm490 = vcmask 1039360
      %v491 = vsel %vm490, %v487, %v489
      %v494 = vsel %vm490, %v489, 0.0
      %v495 = vmul.f32 %v491, %v466
      %v496 = vmul.f32 %v494, %v470
      %497 = vrot.lane.b32.xlu0 %v414, 113
      %v498 = vpop.permute.xlu0 %497
      %499 = vrot.lane.b32.xlu0 %v415, 113
      %v500 = vpop.permute.xlu0 %499
      %vm501 = vcmask 924672
      %v502 = vsel %vm501, %v498, %v500
      %v505 = vsel %vm501, %v500, 0.0
      %v506 = vmul.f32 %v502, %v433
      %v507 = vmul.f32 %v505, %v437
      %508 = vrot.lane.b32.xlu0 %v414, 112
      %v509 = vpop.permute.xlu0 %508
      %510 = vrot.lane.b32.xlu0 %v415, 112
      %v511 = vpop.permute.xlu0 %510
      %vm512 = vcmask 916480
      %v513 = vsel %vm512, %v509, %v511
      %v516 = vsel %vm512, %v511, 0.0
      %517 = vrot.lane.b32.xlu0 %v414, 111
      %v518 = vpop.permute.xlu0 %517
      %519 = vrot.lane.b32.xlu0 %v415, 111
      %v520 = vpop.permute.xlu0 %519
      %vm521 = vcmask 908288
      %v522 = vsel %vm521, %v518, %v520
      %v525 = vsel %vm521, %v520, 0.0
      %v526 = vmul.f32 %v522, %v466
      %v527 = vmul.f32 %v525, %v470
      %v528 = vld [vmem:[%s2] sm:$0xf]
      %vm529 = vcmask 588800
      %v531 = vsel %vm529, %v528, 0
      %533 = vmatprep.subr.mxu0 0.0
      %534 = vmatpush1.msra.mxu0 0.0
      %535 = vmatprep.subr.mxu0 0.0
      %536 = vmatpush1.msra.mxu0 0.0
      %537 = vmatprep.subr.mxu0 0.0
      %538 = vmatpush1.msra.mxu0 0.0
      %539 = vmatprep.subr.mxu0 0.0
      %540 = vmatpush1.msra.mxu0 0.0
      %541 = vmatprep.subr.mxu0 0.0
      %542 = vmatpush1.msra.mxu0 0.0
      %543 = vmatprep.subr.mxu0 0.0
      %544 = vmatpush1.msra.mxu0 0.0
      %545 = vmatprep.subr.mxu0 0.0
      %546 = vmatpush1.msra.mxu0 0.0
      %547 = vmatprep.subr.mxu0 %v527
      %548 = vmatpush1.msra.mxu0 %v526
      %549 = vmatprep.subr.mxu0 %v516
      %550 = vmatpush1.msra.mxu0 %v513
      %551 = vmatprep.subr.mxu0 %v507
      %552 = vmatpush1.msra.mxu0 %v506
      %553 = vmatprep.subr.mxu0 %v496
      %554 = vmatpush1.msra.mxu0 %v495
      %555 = vmatprep.subr.mxu0 %v415
      %556 = vmatpush1.msra.mxu0 %v414
      %557 = vmatprep.subr.mxu0 %v485
      %558 = vmatpush1.msra.mxu0 %v484
      %559 = vmatprep.subr.mxu0 %v474
      %560 = vmatpush1.msra.mxu0 %v473
      %561 = vmatprep.subr.mxu0 %v447
      %562 = vmatpush1.msra.mxu0 %v450
      %563 = vmatprep.subr.mxu0 %v441
      %564 = vmatpush1.msra.mxu0 %v440
      %565 = vmatprep.subr.mxu0 0.0
      %566 = vmatpush2.msra.mxu0 0.0
      %567 = vmatprep.subr.mxu0 0.0
      %568 = vmatpush2.msra.mxu0 0.0
      %569 = vmatprep.subr.mxu0 0.0
      %570 = vmatpush2.msra.mxu0 0.0
      %571 = vmatprep.subr.mxu0 0.0
      %572 = vmatpush2.msra.mxu0 0.0
      %573 = vmatprep.subr.mxu0 0.0
      %574 = vmatpush2.msra.mxu0 0.0
      %575 = vmatprep.subr.mxu0 0.0
      %576 = vmatpush2.msra.mxu0 0.0
      %577 = vmatprep.subr.mxu0 0.0
      %578 = vmatpush2.msra.mxu0 0.0
      %579 = vmatprep.subr.mxu0 0.0
      %580 = vmatpush2.msra.mxu0 0.0
      %581 = vmatprep.subr.mxu0 0.0
      %582 = vmatpush2.msra.mxu0 0.0
      %583 = vmatprep.subr.mxu0 0.0
      %584 = vmatpush2.msra.mxu0 0.0
      %585 = vmatprep.subr.mxu0 0.0
      %586 = vmatpush2.msra.mxu0 0.0
      %587 = vmatprep.subr.mxu0 0.0
      %588 = vmatpush2.msra.mxu0 0.0
      %589 = vmatprep.subr.mxu0 0.0
      %590 = vmatpush2.msra.mxu0 0.0
      %591 = vmatprep.subr.mxu0 0.0
      %592 = vmatpush2.msra.mxu0 0.0
      %593 = vmatprep.subr.mxu0 0.0
      %594 = vmatpush2.msra.mxu0 0.0
      %595 = vmatprep.subr.mxu0 0.0
      %596 = vmatpush2.msra.mxu0 0.0
      %597 = vmatprep.mubr.f32.mxu0 0.0
      %598 = vmatmul.mubr.f32.gmra.mxu0 %v531
      %v599 = vpop.f32.mrf.mxu0
      %v600 = vadd.f32 0.0, %v599
      %v601 = vpop.f32.mrf.mxu0
      %v602 = vadd.f32 0.0, %v601
      %603 = vdwg.mxu0
      %604 = vrot.lane.b32.xlu0 %v414, 34
      %v605 = vpop.permute.xlu0 %604
      %606 = vrot.lane.b32.xlu0 %v415, 34
      %v607 = vpop.permute.xlu0 %606
      %vm608 = vcmask 277504
      %v609 = vsel %vm608, %v605, %v607
      %v612 = vsel %vm608, 0.0, %v605
      %s613 = scalar_lea.vmem %s1, 2
      %v614 = vld [vmem:[%s613] ss:$8 sm:$0x3]
      %v616 = vlaneseq
      %v617 = vshrl.u32 %v616, 7
      %v618 = vsub.s32 0, %v617
      %v619 = vrot.slane %v614, %v618
      %v620 = vlaneseq
      %v621 = vshrl.u32 %v620, 7
      %v622 = vsub.s32 1, %v621
      %v623 = vrot.slane %v614, %v622
      %v626 = vmul.f32 %v612, %v619
      %v627 = vmul.f32 %v609, %v623
      %628 = vrot.lane.b32.xlu0 %v414, 32
      %v629 = vpop.permute.xlu0 %628
      %630 = vrot.lane.b32.xlu0 %v415, 32
      %v631 = vpop.permute.xlu0 %630
      %vm632 = vcmask 261120
      %v633 = vsel %vm632, %v629, %v631
      %v636 = vsel %vm632, 0.0, %v629
      %637 = vrot.lane.b32.xlu0 %v414, 30
      %v638 = vpop.permute.xlu0 %637
      %639 = vrot.lane.b32.xlu0 %v415, 30
      %v640 = vpop.permute.xlu0 %639
      %vm641 = vcmask 244736
      %v642 = vsel %vm641, %v638, %v640
      %v645 = vsel %vm641, 0.0, %v638
      %s646 = scalar_lea.vmem %s1, 6
      %v647 = vld [vmem:[%s646] ss:$8 sm:$0x3]
      %v649 = vlaneseq
      %v650 = vshrl.u32 %v649, 7
      %v651 = vsub.s32 0, %v650
      %v652 = vrot.slane %v647, %v651
      %v653 = vlaneseq
      %v654 = vshrl.u32 %v653, 7
      %v655 = vsub.s32 1, %v654
      %v656 = vrot.slane %v647, %v655
      %v659 = vmul.f32 %v645, %v652
      %v660 = vmul.f32 %v642, %v656
      %661 = vrot.lane.b32.xlu0 %v414, 2
      %v662 = vpop.permute.xlu0 %661
      %663 = vrot.lane.b32.xlu0 %v415, 2
      %v664 = vpop.permute.xlu0 %663
      %vm665 = vcmask 15360
      %v666 = vsel %vm665, %v662, %v664
      %v669 = vsel %vm665, 0.0, %v662
      %v670 = vmul.f32 %v669, %v619
      %v671 = vmul.f32 %v666, %v623
      %672 = vrot.lane.b32.xlu0 %v414, 126
      %v673 = vpop.permute.xlu0 %672
      %674 = vrot.lane.b32.xlu0 %v415, 126
      %v675 = vpop.permute.xlu0 %674
      %vm676 = vcmask 1031168
      %v677 = vsel %vm676, %v673, %v675
      %v680 = vsel %vm676, %v675, 0.0
      %v681 = vmul.f32 %v677, %v652
      %v682 = vmul.f32 %v680, %v656
      %683 = vrot.lane.b32.xlu0 %v414, 98
      %v684 = vpop.permute.xlu0 %683
      %685 = vrot.lane.b32.xlu0 %v415, 98
      %v686 = vpop.permute.xlu0 %685
      %vm687 = vcmask 801792
      %v688 = vsel %vm687, %v684, %v686
      %v691 = vsel %vm687, %v686, 0.0
      %v692 = vmul.f32 %v688, %v619
      %v693 = vmul.f32 %v691, %v623
      %694 = vrot.lane.b32.xlu0 %v414, 96
      %v695 = vpop.permute.xlu0 %694
      %696 = vrot.lane.b32.xlu0 %v415, 96
      %v697 = vpop.permute.xlu0 %696
      %vm698 = vcmask 785408
      %v699 = vsel %vm698, %v695, %v697
      %v702 = vsel %vm698, %v697, 0.0
      %703 = vrot.lane.b32.xlu0 %v414, 94
      %v704 = vpop.permute.xlu0 %703
      %705 = vrot.lane.b32.xlu0 %v415, 94
      %v706 = vpop.permute.xlu0 %705
      %vm707 = vcmask 769024
      %v708 = vsel %vm707, %v704, %v706
      %v711 = vsel %vm707, %v706, 0.0
      %v712 = vmul.f32 %v708, %v652
      %v713 = vmul.f32 %v711, %v656
      %v714 = vld [vmem:[%s2 + $0x4] sm:$0xf]
      %v716 = vsel %vm529, %v714, 0
      %718 = vmatprep.subr.mxu0 0.0
      %719 = vmatpush1.msra.mxu0 0.0
      %720 = vmatprep.subr.mxu0 0.0
      %721 = vmatpush1.msra.mxu0 0.0
      %722 = vmatprep.subr.mxu0 0.0
      %723 = vmatpush1.msra.mxu0 0.0
      %724 = vmatprep.subr.mxu0 0.0
      %725 = vmatpush1.msra.mxu0 0.0
      %726 = vmatprep.subr.mxu0 0.0
      %727 = vmatpush1.msra.mxu0 0.0
      %728 = vmatprep.subr.mxu0 0.0
      %729 = vmatpush1.msra.mxu0 0.0
      %730 = vmatprep.subr.mxu0 0.0
      %731 = vmatpush1.msra.mxu0 0.0
      %732 = vmatprep.subr.mxu0 %v713
      %733 = vmatpush1.msra.mxu0 %v712
      %734 = vmatprep.subr.mxu0 %v702
      %735 = vmatpush1.msra.mxu0 %v699
      %736 = vmatprep.subr.mxu0 %v693
      %737 = vmatpush1.msra.mxu0 %v692
      %738 = vmatprep.subr.mxu0 %v682
      %739 = vmatpush1.msra.mxu0 %v681
      %740 = vmatprep.subr.mxu0 %v415
      %741 = vmatpush1.msra.mxu0 %v414
      %742 = vmatprep.subr.mxu0 %v671
      %743 = vmatpush1.msra.mxu0 %v670
      %744 = vmatprep.subr.mxu0 %v660
      %745 = vmatpush1.msra.mxu0 %v659
      %746 = vmatprep.subr.mxu0 %v633
      %747 = vmatpush1.msra.mxu0 %v636
      %748 = vmatprep.subr.mxu0 %v627
      %749 = vmatpush1.msra.mxu0 %v626
      %750 = vmatprep.subr.mxu0 0.0
      %751 = vmatpush2.msra.mxu0 0.0
      %752 = vmatprep.subr.mxu0 0.0
      %753 = vmatpush2.msra.mxu0 0.0
      %754 = vmatprep.subr.mxu0 0.0
      %755 = vmatpush2.msra.mxu0 0.0
      %756 = vmatprep.subr.mxu0 0.0
      %757 = vmatpush2.msra.mxu0 0.0
      %758 = vmatprep.subr.mxu0 0.0
      %759 = vmatpush2.msra.mxu0 0.0
      %760 = vmatprep.subr.mxu0 0.0
      %761 = vmatpush2.msra.mxu0 0.0
      %762 = vmatprep.subr.mxu0 0.0
      %763 = vmatpush2.msra.mxu0 0.0
      %764 = vmatprep.subr.mxu0 0.0
      %765 = vmatpush2.msra.mxu0 0.0
      %766 = vmatprep.subr.mxu0 0.0
      %767 = vmatpush2.msra.mxu0 0.0
      %768 = vmatprep.subr.mxu0 0.0
      %769 = vmatpush2.msra.mxu0 0.0
      %770 = vmatprep.subr.mxu0 0.0
      %771 = vmatpush2.msra.mxu0 0.0
      %772 = vmatprep.subr.mxu0 0.0
      %773 = vmatpush2.msra.mxu0 0.0
      %774 = vmatprep.subr.mxu0 0.0
      %775 = vmatpush2.msra.mxu0 0.0
      %776 = vmatprep.subr.mxu0 0.0
      %777 = vmatpush2.msra.mxu0 0.0
      %778 = vmatprep.subr.mxu0 0.0
      %779 = vmatpush2.msra.mxu0 0.0
      %780 = vmatprep.subr.mxu0 0.0
      %781 = vmatpush2.msra.mxu0 0.0
      %782 = vmatprep.mubr.f32.mxu0 0.0
      %783 = vmatmul.mubr.f32.gmra.mxu0 %v716
      %v784 = vpop.f32.mrf.mxu0
      %v785 = vadd.f32 0.0, %v784
      %v786 = vpop.f32.mrf.mxu0
      %v787 = vadd.f32 0.0, %v786
      %788 = vdwg.mxu0
      %789 = vrot.lane.b32.xlu0 %v414, 51
      %v790 = vpop.permute.xlu0 %789
      %791 = vrot.lane.b32.xlu0 %v415, 51
      %v792 = vpop.permute.xlu0 %791
      %vm793 = vcmask 416768
      %v794 = vsel %vm793, %v790, %v792
      %v797 = vsel %vm793, 0.0, %v790
      %s798 = scalar_lea.vmem %s1, 1
      %v799 = vld [vmem:[%s798] ss:$8 sm:$0x3]
      %v801 = vlaneseq
      %v802 = vshrl.u32 %v801, 7
      %v803 = vsub.s32 0, %v802
      %v804 = vrot.slane %v799, %v803
      %v805 = vlaneseq
      %v806 = vshrl.u32 %v805, 7
      %v807 = vsub.s32 1, %v806
      %v808 = vrot.slane %v799, %v807
      %v811 = vmul.f32 %v797, %v804
      %v812 = vmul.f32 %v794, %v808
      %813 = vrot.lane.b32.xlu0 %v414, 48
      %v814 = vpop.permute.xlu0 %813
      %815 = vrot.lane.b32.xlu0 %v415, 48
      %v816 = vpop.permute.xlu0 %815
      %vm817 = vcmask 392192
      %v818 = vsel %vm817, %v814, %v816
      %v821 = vsel %vm817, 0.0, %v814
      %822 = vrot.lane.b32.xlu0 %v414, 45
      %v823 = vpop.permute.xlu0 %822
      %824 = vrot.lane.b32.xlu0 %v415, 45
      %v825 = vpop.permute.xlu0 %824
      %vm826 = vcmask 367616
      %v827 = vsel %vm826, %v823, %v825
      %v830 = vsel %vm826, 0.0, %v823
      %s831 = scalar_lea.vmem %s1, 7
      %v832 = vld [vmem:[%s831] ss:$8 sm:$0x3]
      %v834 = vlaneseq
      %v835 = vshrl.u32 %v834, 7
      %v836 = vsub.s32 0, %v835
      %v837 = vrot.slane %v832, %v836
      %v838 = vlaneseq
      %v839 = vshrl.u32 %v838, 7
      %v840 = vsub.s32 1, %v839
      %v841 = vrot.slane %v832, %v840
      %v844 = vmul.f32 %v830, %v837
      %v845 = vmul.f32 %v827, %v841
      %846 = vrot.lane.b32.xlu0 %v414, 3
      %v847 = vpop.permute.xlu0 %846
      %848 = vrot.lane.b32.xlu0 %v415, 3
      %v849 = vpop.permute.xlu0 %848
      %vm850 = vcmask 23552
      %v851 = vsel %vm850, %v847, %v849
      %v854 = vsel %vm850, 0.0, %v847
      %v855 = vmul.f32 %v854, %v804
      %v856 = vmul.f32 %v851, %v808
      %857 = vrot.lane.b32.xlu0 %v414, 125
      %v858 = vpop.permute.xlu0 %857
      %859 = vrot.lane.b32.xlu0 %v415, 125
      %v860 = vpop.permute.xlu0 %859
      %vm861 = vcmask 1022976
      %v862 = vsel %vm861, %v858, %v860
      %v865 = vsel %vm861, %v860, 0.0
      %v866 = vmul.f32 %v862, %v837
      %v867 = vmul.f32 %v865, %v841
      %868 = vrot.lane.b32.xlu0 %v414, 83
      %v869 = vpop.permute.xlu0 %868
      %870 = vrot.lane.b32.xlu0 %v415, 83
      %v871 = vpop.permute.xlu0 %870
      %vm872 = vcmask 678912
      %v873 = vsel %vm872, %v869, %v871
      %v876 = vsel %vm872, %v871, 0.0
      %v877 = vmul.f32 %v873, %v804
      %v878 = vmul.f32 %v876, %v808
      %879 = vrot.lane.b32.xlu0 %v414, 80
      %v880 = vpop.permute.xlu0 %879
      %881 = vrot.lane.b32.xlu0 %v415, 80
      %v882 = vpop.permute.xlu0 %881
      %vm883 = vcmask 654336
      %v884 = vsel %vm883, %v880, %v882
      %v887 = vsel %vm883, %v882, 0.0
      %888 = vrot.lane.b32.xlu0 %v414, 77
      %v889 = vpop.permute.xlu0 %888
      %890 = vrot.lane.b32.xlu0 %v415, 77
      %v891 = vpop.permute.xlu0 %890
      %vm892 = vcmask 629760
      %v893 = vsel %vm892, %v889, %v891
      %v896 = vsel %vm892, %v891, 0.0
      %v897 = vmul.f32 %v893, %v837
      %v898 = vmul.f32 %v896, %v841
      %v899 = vld [vmem:[%s2 + $0x8] sm:$0xf]
      %v901 = vsel %vm529, %v899, 0
      %903 = vmatprep.subr.mxu0 0.0
      %904 = vmatpush1.msra.mxu0 0.0
      %905 = vmatprep.subr.mxu0 0.0
      %906 = vmatpush1.msra.mxu0 0.0
      %907 = vmatprep.subr.mxu0 0.0
      %908 = vmatpush1.msra.mxu0 0.0
      %909 = vmatprep.subr.mxu0 0.0
      %910 = vmatpush1.msra.mxu0 0.0
      %911 = vmatprep.subr.mxu0 0.0
      %912 = vmatpush1.msra.mxu0 0.0
      %913 = vmatprep.subr.mxu0 0.0
      %914 = vmatpush1.msra.mxu0 0.0
      %915 = vmatprep.subr.mxu0 0.0
      %916 = vmatpush1.msra.mxu0 0.0
      %917 = vmatprep.subr.mxu0 %v898
      %918 = vmatpush1.msra.mxu0 %v897
      %919 = vmatprep.subr.mxu0 %v887
      %920 = vmatpush1.msra.mxu0 %v884
      %921 = vmatprep.subr.mxu0 %v878
      %922 = vmatpush1.msra.mxu0 %v877
      %923 = vmatprep.subr.mxu0 %v867
      %924 = vmatpush1.msra.mxu0 %v866
      %925 = vmatprep.subr.mxu0 %v415
      %926 = vmatpush1.msra.mxu0 %v414
      %927 = vmatprep.subr.mxu0 %v856
      %928 = vmatpush1.msra.mxu0 %v855
      %929 = vmatprep.subr.mxu0 %v845
      %930 = vmatpush1.msra.mxu0 %v844
      %931 = vmatprep.subr.mxu0 %v818
      %932 = vmatpush1.msra.mxu0 %v821
      %933 = vmatprep.subr.mxu0 %v812
      %934 = vmatpush1.msra.mxu0 %v811
      %935 = vmatprep.subr.mxu0 0.0
      %936 = vmatpush2.msra.mxu0 0.0
      %937 = vmatprep.subr.mxu0 0.0
      %938 = vmatpush2.msra.mxu0 0.0
      %939 = vmatprep.subr.mxu0 0.0
      %940 = vmatpush2.msra.mxu0 0.0
      %941 = vmatprep.subr.mxu0 0.0
      %942 = vmatpush2.msra.mxu0 0.0
      %943 = vmatprep.subr.mxu0 0.0
      %944 = vmatpush2.msra.mxu0 0.0
      %945 = vmatprep.subr.mxu0 0.0
      %946 = vmatpush2.msra.mxu0 0.0
      %947 = vmatprep.subr.mxu0 0.0
      %948 = vmatpush2.msra.mxu0 0.0
      %949 = vmatprep.subr.mxu0 0.0
      %950 = vmatpush2.msra.mxu0 0.0
      %951 = vmatprep.subr.mxu0 0.0
      %952 = vmatpush2.msra.mxu0 0.0
      %953 = vmatprep.subr.mxu0 0.0
      %954 = vmatpush2.msra.mxu0 0.0
      %955 = vmatprep.subr.mxu0 0.0
      %956 = vmatpush2.msra.mxu0 0.0
      %957 = vmatprep.subr.mxu0 0.0
      %958 = vmatpush2.msra.mxu0 0.0
      %959 = vmatprep.subr.mxu0 0.0
      %960 = vmatpush2.msra.mxu0 0.0
      %961 = vmatprep.subr.mxu0 0.0
      %962 = vmatpush2.msra.mxu0 0.0
      %963 = vmatprep.subr.mxu0 0.0
      %964 = vmatpush2.msra.mxu0 0.0
      %965 = vmatprep.subr.mxu0 0.0
      %966 = vmatpush2.msra.mxu0 0.0
      %967 = vmatprep.mubr.f32.mxu0 0.0
      %968 = vmatmul.mubr.f32.gmra.mxu0 %v901
      %v969 = vpop.f32.mrf.mxu0
      %v970 = vadd.f32 0.0, %v969
      %v971 = vpop.f32.mrf.mxu0
      %v972 = vadd.f32 0.0, %v971
      %973 = vdwg.mxu0
      %974 = vrot.lane.b32.xlu0 %v414, 68
      %v975 = vpop.permute.xlu0 %974
      %976 = vrot.lane.b32.xlu0 %v415, 68
      %v977 = vpop.permute.xlu0 %976
      %vm978 = vcmask 556032
      %v979 = vsel %vm978, %v975, %v977
      %v982 = vsel %vm978, 0.0, %v975
      %v983 = vld [vmem:[%s1] ss:$8 sm:$0x3]
      %v985 = vlaneseq
      %v986 = vshrl.u32 %v985, 7
      %v987 = vsub.s32 0, %v986
      %v988 = vrot.slane %v983, %v987
      %v989 = vlaneseq
      %v990 = vshrl.u32 %v989, 7
      %v991 = vsub.s32 1, %v990
      %v992 = vrot.slane %v983, %v991
      %v995 = vmul.f32 %v982, %v988
      %v996 = vmul.f32 %v979, %v992
      %997 = vrot.lane.b32.xlu0 %v414, 64
      %v998 = vpop.permute.xlu0 %997
      %999 = vrot.lane.b32.xlu0 %v415, 64
      %v1000 = vpop.permute.xlu0 %999
      %vm1001 = vcmask 523264
      %v1002 = vsel %vm1001, %v998, %v1000
      %v1005 = vsel %vm1001, 0.0, %v998
      %1006 = vrot.lane.b32.xlu0 %v414, 60
      %v1007 = vpop.permute.xlu0 %1006
      %1008 = vrot.lane.b32.xlu0 %v415, 60
      %v1009 = vpop.permute.xlu0 %1008
      %vm1010 = vcmask 490496
      %v1011 = vsel %vm1010, %v1007, %v1009
      %v1014 = vsel %vm1010, 0.0, %v1007
      %s1015 = scalar_lea.vmem %s1, 16
      %v1016 = vld [vmem:[%s1015] ss:$8 sm:$0x3]
      %v1018 = vlaneseq
      %v1019 = vshrl.u32 %v1018, 7
      %v1020 = vsub.s32 0, %v1019
      %v1021 = vrot.slane %v1016, %v1020
      %v1022 = vlaneseq
      %v1023 = vshrl.u32 %v1022, 7
      %v1024 = vsub.s32 1, %v1023
      %v1025 = vrot.slane %v1016, %v1024
      %v1028 = vmul.f32 %v1014, %v1021
      %v1029 = vmul.f32 %v1011, %v1025
      %1030 = vrot.lane.b32.xlu0 %v414, 4
      %v1031 = vpop.permute.xlu0 %1030
      %1032 = vrot.lane.b32.xlu0 %v415, 4
      %v1033 = vpop.permute.xlu0 %1032
      %vm1034 = vcmask 31744
      %v1035 = vsel %vm1034, %v1031, %v1033
      %v1038 = vsel %vm1034, 0.0, %v1031
      %v1039 = vmul.f32 %v1038, %v988
      %v1040 = vmul.f32 %v1035, %v992
      %1041 = vrot.lane.b32.xlu0 %v414, 124
      %v1042 = vpop.permute.xlu0 %1041
      %1043 = vrot.lane.b32.xlu0 %v415, 124
      %v1044 = vpop.permute.xlu0 %1043
      %vm1045 = vcmask 1014784
      %v1046 = vsel %vm1045, %v1042, %v1044
      %v1049 = vsel %vm1045, %v1044, 0.0
      %v1050 = vmul.f32 %v1046, %v1021
      %v1051 = vmul.f32 %v1049, %v1025
      %v1053 = vsel %vm978, %v977, 0.0
      %v1054 = vmul.f32 %v979, %v988
      %v1055 = vmul.f32 %v1053, %v992
      %v1057 = vsel %vm1001, %v1000, 0.0
      %v1059 = vsel %vm1010, %v1009, 0.0
      %v1060 = vmul.f32 %v1011, %v1021
      %v1061 = vmul.f32 %v1059, %v1025
      %v1062 = vld [vmem:[%s2 + $0xc] sm:$0xf]
      %v1064 = vsel %vm529, %v1062, 0
      %1066 = vmatprep.subr.mxu0 0.0
      %1067 = vmatpush1.msra.mxu0 0.0
      %1068 = vmatprep.subr.mxu0 0.0
      %1069 = vmatpush1.msra.mxu0 0.0
      %1070 = vmatprep.subr.mxu0 0.0
      %1071 = vmatpush1.msra.mxu0 0.0
      %1072 = vmatprep.subr.mxu0 0.0
      %1073 = vmatpush1.msra.mxu0 0.0
      %1074 = vmatprep.subr.mxu0 0.0
      %1075 = vmatpush1.msra.mxu0 0.0
      %1076 = vmatprep.subr.mxu0 0.0
      %1077 = vmatpush1.msra.mxu0 0.0
      %1078 = vmatprep.subr.mxu0 0.0
      %1079 = vmatpush1.msra.mxu0 0.0
      %1080 = vmatprep.subr.mxu0 %v1061
      %1081 = vmatpush1.msra.mxu0 %v1060
      %1082 = vmatprep.subr.mxu0 %v1057
      %1083 = vmatpush1.msra.mxu0 %v1002
      %1084 = vmatprep.subr.mxu0 %v1055
      %1085 = vmatpush1.msra.mxu0 %v1054
      %1086 = vmatprep.subr.mxu0 %v1051
      %1087 = vmatpush1.msra.mxu0 %v1050
      %1088 = vmatprep.subr.mxu0 %v415
      %1089 = vmatpush1.msra.mxu0 %v414
      %1090 = vmatprep.subr.mxu0 %v1040
      %1091 = vmatpush1.msra.mxu0 %v1039
      %1092 = vmatprep.subr.mxu0 %v1029
      %1093 = vmatpush1.msra.mxu0 %v1028
      %1094 = vmatprep.subr.mxu0 %v1002
      %1095 = vmatpush1.msra.mxu0 %v1005
      %1096 = vmatprep.subr.mxu0 %v996
      %1097 = vmatpush1.msra.mxu0 %v995
      %1098 = vmatprep.subr.mxu0 0.0
      %1099 = vmatpush2.msra.mxu0 0.0
      %1100 = vmatprep.subr.mxu0 0.0
      %1101 = vmatpush2.msra.mxu0 0.0
      %1102 = vmatprep.subr.mxu0 0.0
      %1103 = vmatpush2.msra.mxu0 0.0
      %1104 = vmatprep.subr.mxu0 0.0
      %1105 = vmatpush2.msra.mxu0 0.0
      %1106 = vmatprep.subr.mxu0 0.0
      %1107 = vmatpush2.msra.mxu0 0.0
      %1108 = vmatprep.subr.mxu0 0.0
      %1109 = vmatpush2.msra.mxu0 0.0
      %1110 = vmatprep.subr.mxu0 0.0
      %1111 = vmatpush2.msra.mxu0 0.0
      %1112 = vmatprep.subr.mxu0 0.0
      %1113 = vmatpush2.msra.mxu0 0.0
      %1114 = vmatprep.subr.mxu0 0.0
      %1115 = vmatpush2.msra.mxu0 0.0
      %1116 = vmatprep.subr.mxu0 0.0
      %1117 = vmatpush2.msra.mxu0 0.0
      %1118 = vmatprep.subr.mxu0 0.0
      %1119 = vmatpush2.msra.mxu0 0.0
      %1120 = vmatprep.subr.mxu0 0.0
      %1121 = vmatpush2.msra.mxu0 0.0
      %1122 = vmatprep.subr.mxu0 0.0
      %1123 = vmatpush2.msra.mxu0 0.0
      %1124 = vmatprep.subr.mxu0 0.0
      %1125 = vmatpush2.msra.mxu0 0.0
      %1126 = vmatprep.subr.mxu0 0.0
      %1127 = vmatpush2.msra.mxu0 0.0
      %1128 = vmatprep.subr.mxu0 0.0
      %1129 = vmatpush2.msra.mxu0 0.0
      %1130 = vmatprep.mubr.f32.mxu0 0.0
      %1131 = vmatmul.mubr.f32.gmra.mxu0 %v1064
      %v1132 = vpop.f32.mrf.mxu0
      %v1133 = vadd.f32 0.0, %v1132
      %v1134 = vpop.f32.mrf.mxu0
      %v1135 = vadd.f32 0.0, %v1134
      %1136 = vdwg.mxu0
      %v1139 = vrot.slane %v785, 4
      %v1140 = vrot.slane %v787, 4
      %v1145 = vrot.slane %v1133, 4
      %v1146 = vrot.slane %v1135, 4
      %vm1149 = vcmask 1043456
      %v1150 = vsel %vm1149, %v600, %v1139
      %v1151 = vsel %vm1149, %v602, %v1140
      %v1152 = vsel %vm1149, %v970, %v1145
      %v1153 = vsel %vm1149, %v972, %v1146
      %v1154 = vld [vmem:[%s3] sm:$0xff]
      %v1155 = vld [vmem:[%s3 + $0x8] sm:$0xff]
      %1157 = vset.pattern.permute.xlu0 0
      %1158 = vperm.xlu0 %1157, %v1154
      %v1159 = vpop.permute.xlu0 %1158
      %1162 = vset.pattern.permute.xlu0 0
      %1163 = vperm.xlu0 %1162, %v1155
      %v1164 = vpop.permute.xlu0 %1163
      %v1166 = vadd.f32 %v1150, %v1159
      %v1167 = vadd.f32 %v1151, %v1159
      %v1168 = vadd.f32 %v1152, %v1164
      %v1169 = vadd.f32 %v1153, %v1164
      %v1170 = vld [vmem:[%s4] sm:$0xf]
      %v1171 = vld [vmem:[%s5] sm:$0xf]
      %1173 = vset.pattern.permute.xlu0 0
      %1174 = vperm.xlu0 %1173, %v1171
      %v1175 = vpop.permute.xlu0 %1174
      %v1178 = vsel %vm446, %v1170, 0
      %1180 = vmatprep.subr.mxu0 0.0
      %1181 = vmatpush1.msra.mxu0 0.0
      %1182 = vmatprep.subr.mxu0 0.0
      %1183 = vmatpush1.msra.mxu0 0.0
      %1184 = vmatprep.subr.mxu0 0.0
      %1185 = vmatpush1.msra.mxu0 0.0
      %1186 = vmatprep.subr.mxu0 0.0
      %1187 = vmatpush1.msra.mxu0 0.0
      %1188 = vmatprep.subr.mxu0 0.0
      %1189 = vmatpush1.msra.mxu0 0.0
      %1190 = vmatprep.subr.mxu0 0.0
      %1191 = vmatpush1.msra.mxu0 0.0
      %1192 = vmatprep.subr.mxu0 0.0
      %1193 = vmatpush1.msra.mxu0 0.0
      %1194 = vmatprep.subr.mxu0 0.0
      %1195 = vmatpush1.msra.mxu0 0.0
      %1196 = vmatprep.subr.mxu0 0.0
      %1197 = vmatpush1.msra.mxu0 0.0
      %1198 = vmatprep.subr.mxu0 0.0
      %1199 = vmatpush1.msra.mxu0 0.0
      %1200 = vmatprep.subr.mxu0 0.0
      %1201 = vmatpush1.msra.mxu0 0.0
      %1202 = vmatprep.subr.mxu0 0.0
      %1203 = vmatpush1.msra.mxu0 0.0
      %1204 = vmatprep.subr.mxu0 0.0
      %1205 = vmatpush1.msra.mxu0 0.0
      %1206 = vmatprep.subr.mxu0 0.0
      %1207 = vmatpush1.msra.mxu0 0.0
      %1208 = vmatprep.subr.mxu0 %v1169
      %1209 = vmatpush1.msra.mxu0 %v1168
      %1210 = vmatprep.subr.mxu0 %v1167
      %1211 = vmatpush1.msra.mxu0 %v1166
      %1212 = vmatprep.subr.mxu0 0.0
      %1213 = vmatpush2.msra.mxu0 0.0
      %1214 = vmatprep.subr.mxu0 0.0
      %1215 = vmatpush2.msra.mxu0 0.0
      %1216 = vmatprep.subr.mxu0 0.0
      %1217 = vmatpush2.msra.mxu0 0.0
      %1218 = vmatprep.subr.mxu0 0.0
      %1219 = vmatpush2.msra.mxu0 0.0
      %1220 = vmatprep.subr.mxu0 0.0
      %1221 = vmatpush2.msra.mxu0 0.0
      %1222 = vmatprep.subr.mxu0 0.0
      %1223 = vmatpush2.msra.mxu0 0.0
      %1224 = vmatprep.subr.mxu0 0.0
      %1225 = vmatpush2.msra.mxu0 0.0
      %1226 = vmatprep.subr.mxu0 0.0
      %1227 = vmatpush2.msra.mxu0 0.0
      %1228 = vmatprep.subr.mxu0 0.0
      %1229 = vmatpush2.msra.mxu0 0.0
      %1230 = vmatprep.subr.mxu0 0.0
      %1231 = vmatpush2.msra.mxu0 0.0
      %1232 = vmatprep.subr.mxu0 0.0
      %1233 = vmatpush2.msra.mxu0 0.0
      %1234 = vmatprep.subr.mxu0 0.0
      %1235 = vmatpush2.msra.mxu0 0.0
      %1236 = vmatprep.subr.mxu0 0.0
      %1237 = vmatpush2.msra.mxu0 0.0
      %1238 = vmatprep.subr.mxu0 0.0
      %1239 = vmatpush2.msra.mxu0 0.0
      %1240 = vmatprep.subr.mxu0 0.0
      %1241 = vmatpush2.msra.mxu0 0.0
      %1242 = vmatprep.subr.mxu0 0.0
      %1243 = vmatpush2.msra.mxu0 0.0
      %1244 = vmatprep.mubr.f32.mxu0 0.0
      %1245 = vmatmul.mubr.f32.gmra.mxu0 %v1178
      %v1246 = vpop.f32.mrf.mxu0
      %v1247 = vadd.f32 %v1175, %v1246
      %v1248 = vpop.f32.mrf.mxu0
      %v1249 = vadd.f32 %v1175, %v1248
      %1250 = vdwg.mxu0
      %v1251 = vld [vmem:[%s6] sm:$0xf]
      %1253 = vset.pattern.permute.xlu0 0
      %1254 = vperm.xlu0 %1253, %v1251
      %v1255 = vpop.permute.xlu0 %1254
      %v1257 = vmul.f32 %v1247, %v1255
      %v1258 = vmul.f32 %v1249, %v1255
      %v1259 = vld [vmem:[%s7] sm:$0xf]
      %1261 = vset.pattern.permute.xlu0 0
      %1262 = vperm.xlu0 %1261, %v1259
      %v1263 = vpop.permute.xlu0 %1262
      %v1265 = vadd.f32 %v1257, %v1263
      %v1266 = vadd.f32 %v1258, %v1263
      %v1267 = vmax.f32 %v1265, 0.0
      %v1268 = vmax.f32 %v1266, 0.0
      %v1269 = vsel %vm1149, %v1267, 0.0
      %v1270 = vsel %vm1149, %v1268, 0.0
      %v1271 = vadd.f32 %v1269, %v1270
      %1272 = vadd.xlane.f32.xlu0 %v1271
      %v1273 = vpop.xlane.xlu0 %1272
      %v1274 = vrcp.pop 256.0
      %v1275 = vmul.f32 %v1273, %v1274
      %v1276 = vsub.f32 %v1267, %v1275
      %v1277 = vsub.f32 %v1268, %v1275
      %v1278 = vmul.f32 %v1276, %v1276
      %v1279 = vmul.f32 %v1277, %v1277
      %v1280 = vsel %vm1149, %v1278, 0.0
      %v1281 = vsel %vm1149, %v1279, 0.0
      %v1282 = vadd.f32 %v1280, %v1281
      %1283 = vadd.xlane.f32.xlu0 %v1282
      %v1284 = vpop.xlane.xlu0 %1283
      %v1285 = vrcp.pop 255.0
      %v1286 = vmul.f32 %v1284, %v1285
      %v1287 = vadd.f32 %v1286, 0.0001
      %v1288 = vmul.f32 %v1287, 4.0
      %v1289 = vrcp.pop %v1288
      %v1290 = vmul.f32 %v1278, %v1289
      %v1291 = vmul.f32 %v1279, %v1289
      %v1292 = vadd.f32 %v1290, 0.5
      %v1293 = vadd.f32 %v1291, 0.5
      %v1294 = vsub.f32 0.0, %v1292
      %v1295 = vsub.f32 0.0, %v1293
      %v1296 = vmul.f32 %v1294, 1.442695
      %v1297 = vpow.pop %v1296
      %v1298 = vmul.f32 %v1295, 1.442695
      %v1299 = vpow.pop %v1298
      %v1300 = vadd.f32 %v1297, 1.0
      %v1301 = vadd.f32 %v1299, 1.0
      %v1302 = vrcp.pop %v1300
      %v1303 = vrcp.pop %v1301
      %v1304 = vmul.f32 %v1267, %v1302
      %v1305 = vmul.f32 %v1268, %v1303
      %v1306 = vadd.f32 %v1304, %v414
      %v1307 = vadd.f32 %v1305, %v415
      %v1308 = vrot.slane %v414, 4
      %v1309 = vrot.slane %v415, 4
      %v1312 = vadd.f32 %v1306, %v1308
      %v1313 = vadd.f32 %v1307, %v1309
      %vm1314 = vcmask 1047556
      %v1315 = vsel %vm1314, %v414, 0.0
      %v1316 = vsel %vm1314, %v415, 0.0
      %v1317 = vadd.f32 %v1315, %v1316
      %1318 = vadd.xlane.f32.xlu0 %v1317
      %v1319 = vpop.xlane.xlu0 %1318
      %v1320 = vmul.f32 %v1319, %v1274
      %v1321 = vsub.f32 %v414, %v1320
      %v1322 = vsub.f32 %v415, %v1320
      %v1323 = vmul.f32 %v1321, %v1321
      %v1324 = vmul.f32 %v1322, %v1322
      %v1325 = vsel %vm1314, %v1323, 0.0
      %v1326 = vsel %vm1314, %v1324, 0.0
      %v1327 = vadd.f32 %v1325, %v1326
      %1328 = vadd.xlane.f32.xlu0 %v1327
      %v1329 = vpop.xlane.xlu0 %1328
      %v1330 = vmul.f32 %v1329, %v1285
      %v1331 = vadd.f32 %v1330, 0.0001
      %v1332 = vmul.f32 %v1331, 4.0
      %v1333 = vrcp.pop %v1332
      %v1334 = vmul.f32 %v1323, %v1333
      %v1335 = vmul.f32 %v1324, %v1333
      %v1336 = vadd.f32 %v1334, 0.5
      %v1337 = vadd.f32 %v1335, 0.5
      %v1338 = vsub.f32 0.0, %v1336
      %v1339 = vsub.f32 0.0, %v1337
      %v1340 = vmul.f32 %v1338, 1.442695
      %v1341 = vpow.pop %v1340
      %v1342 = vmul.f32 %v1339, 1.442695
      %v1343 = vpow.pop %v1342
      %v1344 = vadd.f32 %v1341, 1.0
      %v1345 = vadd.f32 %v1343, 1.0
      %v1346 = vrcp.pop %v1344
      %v1347 = vrcp.pop %v1345
      %v1348 = vmul.f32 %v414, %v1346
      %v1349 = vmul.f32 %v415, %v1347
      %v1352 = vrot.slane %v1267, 4
      %v1353 = vrot.slane %v1268, 4
      %v1356 = vmul.f32 %v1348, %v1352
      %v1357 = vmul.f32 %v1349, %v1353
      %v1360 = vrot.slane %v1356, 4
      %v1361 = vrot.slane %v1357, 4
      %v1364 = vadd.f32 %v1312, %v1360
      %v1365 = vadd.f32 %v1313, %v1361
      %v1366 = vsel %vm1149, %v414, 0.0
      %v1367 = vsel %vm1149, %v415, 0.0
      %v1368 = vadd.f32 %v1366, %v1367
      %1369 = vadd.xlane.f32.xlu0 %v1368
      %v1370 = vpop.xlane.xlu0 %1369
      %v1371 = vmul.f32 %v1370, %v1274
      %v1372 = vsub.f32 %v414, %v1371
      %v1373 = vsub.f32 %v415, %v1371
      %v1374 = vmul.f32 %v1372, %v1372
      %v1375 = vmul.f32 %v1373, %v1373
      %v1376 = vsel %vm1149, %v1374, 0.0
      %v1377 = vsel %vm1149, %v1375, 0.0
      %v1378 = vadd.f32 %v1376, %v1377
      %1379 = vadd.xlane.f32.xlu0 %v1378
      %v1380 = vpop.xlane.xlu0 %1379
      %v1381 = vmul.f32 %v1380, %v1285
      %v1382 = vadd.f32 %v1381, 0.0001
      %v1383 = vmul.f32 %v1382, 4.0
      %v1384 = vrcp.pop %v1383
      %v1385 = vmul.f32 %v1374, %v1384
      %v1386 = vmul.f32 %v1375, %v1384
      %v1387 = vadd.f32 %v1385, 0.5
      %v1388 = vadd.f32 %v1386, 0.5
      %v1389 = vsub.f32 0.0, %v1387
      %v1390 = vsub.f32 0.0, %v1388
      %v1391 = vmul.f32 %v1389, 1.442695
      %v1392 = vpow.pop %v1391
      %v1393 = vmul.f32 %v1390, 1.442695
      %v1394 = vpow.pop %v1393
      %v1395 = vadd.f32 %v1392, 1.0
      %v1396 = vadd.f32 %v1394, 1.0
      %v1397 = vrcp.pop %v1395
      %v1398 = vrcp.pop %v1396
      %v1399 = vmul.f32 %v414, %v1397
      %v1400 = vmul.f32 %v415, %v1398
      %v1401 = vmul.f32 %v1399, %v1267
      %v1402 = vmul.f32 %v1400, %v1268
      %v1403 = vadd.f32 %v1364, %v1401
      %v1404 = vadd.f32 %v1365, %v1402
      %1407 = vrot.lane.b32.xlu0 %v1403, 17
      %v1408 = vpop.permute.xlu0 %1407
      %1409 = vrot.lane.b32.xlu0 %v1404, 17
      %v1410 = vpop.permute.xlu0 %1409
      %v1411 = vsel %vm422, %v1408, %v1410
      %v1414 = vsel %vm422, 0.0, %v1408
      %v1415 = vmul.f32 %v1414, %v433
      %v1416 = vmul.f32 %v1411, %v437
      %1417 = vrot.lane.b32.xlu0 %v1403, 16
      %v1418 = vpop.permute.xlu0 %1417
      %1419 = vrot.lane.b32.xlu0 %v1404, 16
      %v1420 = vpop.permute.xlu0 %1419
      %v1421 = vsel %vm446, %v1418, %v1420
      %v1423 = vsel %vm446, 0.0, %v1418
      %1424 = vrot.lane.b32.xlu0 %v1403, 15
      %v1425 = vpop.permute.xlu0 %1424
      %1426 = vrot.lane.b32.xlu0 %v1404, 15
      %v1427 = vpop.permute.xlu0 %1426
      %v1428 = vsel %vm455, %v1425, %v1427
      %v1431 = vsel %vm455, 0.0, %v1425
      %v1432 = vmul.f32 %v1431, %v466
      %v1433 = vmul.f32 %v1428, %v470
      %1434 = vrot.lane.b32.xlu0 %v1403, 1
      %v1435 = vpop.permute.xlu0 %1434
      %1436 = vrot.lane.b32.xlu0 %v1404, 1
      %v1437 = vpop.permute.xlu0 %1436
      %v1438 = vsel %vm479, %v1435, %v1437
      %v1441 = vsel %vm479, 0.0, %v1435
      %v1442 = vmul.f32 %v1441, %v433
      %v1443 = vmul.f32 %v1438, %v437
      %1444 = vrot.lane.b32.xlu0 %v1403, 127
      %v1445 = vpop.permute.xlu0 %1444
      %1446 = vrot.lane.b32.xlu0 %v1404, 127
      %v1447 = vpop.permute.xlu0 %1446
      %v1448 = vsel %vm490, %v1445, %v1447
      %v1451 = vsel %vm490, %v1447, 0.0
      %v1452 = vmul.f32 %v1448, %v466
      %v1453 = vmul.f32 %v1451, %v470
      %1454 = vrot.lane.b32.xlu0 %v1403, 113
      %v1455 = vpop.permute.xlu0 %1454
      %1456 = vrot.lane.b32.xlu0 %v1404, 113
      %v1457 = vpop.permute.xlu0 %1456
      %v1458 = vsel %vm501, %v1455, %v1457
      %v1461 = vsel %vm501, %v1457, 0.0
      %v1462 = vmul.f32 %v1458, %v433
      %v1463 = vmul.f32 %v1461, %v437
      %1464 = vrot.lane.b32.xlu0 %v1403, 112
      %v1465 = vpop.permute.xlu0 %1464
      %1466 = vrot.lane.b32.xlu0 %v1404, 112
      %v1467 = vpop.permute.xlu0 %1466
      %v1468 = vsel %vm512, %v1465, %v1467
      %v1470 = vsel %vm512, %v1467, 0.0
      %1471 = vrot.lane.b32.xlu0 %v1403, 111
      %v1472 = vpop.permute.xlu0 %1471
      %1473 = vrot.lane.b32.xlu0 %v1404, 111
      %v1474 = vpop.permute.xlu0 %1473
      %v1475 = vsel %vm521, %v1472, %v1474
      %v1478 = vsel %vm521, %v1474, 0.0
      %v1479 = vmul.f32 %v1475, %v466
      %v1480 = vmul.f32 %v1478, %v470
      %v1482 = vrot.slane %v1423, 4
      %v1483 = vrot.slane %v1421, 4
      %v1488 = vrot.slane %v1442, 4
      %v1489 = vrot.slane %v1443, 4
      %v1494 = vrot.slane %v1452, 4
      %v1495 = vrot.slane %v1453, 4
      %v1499 = vrot.slane %v1468, 4
      %v1500 = vrot.slane %v1470, 4
      %v1503 = vsel %vm1149, %v1415, %v1482
      %v1504 = vsel %vm1149, %v1416, %v1483
      %v1505 = vsel %vm1149, %v1432, %v1488
      %v1506 = vsel %vm1149, %v1433, %v1489
      %v1507 = vsel %vm1149, %v1403, %v1494
      %v1508 = vsel %vm1149, %v1404, %v1495
      %v1509 = vsel %vm1149, %v1462, %v1499
      %v1510 = vsel %vm1149, %v1463, %v1500
      %v1511 = vld [vmem:[%s8] sm:$0xf]
      %v1512 = vld [vmem:[%s9] sm:$0xf]
      %1514 = vset.pattern.permute.xlu0 0
      %1515 = vperm.xlu0 %1514, %v1512
      %v1516 = vpop.permute.xlu0 %1515
      %vm1518 = vcmask 293888
      %v1520 = vsel %vm1518, %v1511, 0
      %v1523 = vsel %vm1149, %v1479, 0
      %v1526 = vsel %vm1149, %v1480, 0
      %1528 = vmatprep.subr.mxu0 0.0
      %1529 = vmatpush1.msra.mxu0 0.0
      %1530 = vmatprep.subr.mxu0 0.0
      %1531 = vmatpush1.msra.mxu0 0.0
      %1532 = vmatprep.subr.mxu0 0.0
      %1533 = vmatpush1.msra.mxu0 0.0
      %1534 = vmatprep.subr.mxu0 0.0
      %1535 = vmatpush1.msra.mxu0 0.0
      %1536 = vmatprep.subr.mxu0 0.0
      %1537 = vmatpush1.msra.mxu0 0.0
      %1538 = vmatprep.subr.mxu0 0.0
      %1539 = vmatpush1.msra.mxu0 0.0
      %1540 = vmatprep.subr.mxu0 0.0
      %1541 = vmatpush1.msra.mxu0 0.0
      %1542 = vmatprep.subr.mxu0 0.0
      %1543 = vmatpush1.msra.mxu0 0.0
      %1544 = vmatprep.subr.mxu0 0.0
      %1545 = vmatpush1.msra.mxu0 0.0
      %1546 = vmatprep.subr.mxu0 0.0
      %1547 = vmatpush1.msra.mxu0 0.0
      %1548 = vmatprep.subr.mxu0 0.0
      %1549 = vmatpush1.msra.mxu0 0.0
      %1550 = vmatprep.subr.mxu0 %v1526
      %1551 = vmatpush1.msra.mxu0 %v1523
      %1552 = vmatprep.subr.mxu0 %v1510
      %1553 = vmatpush1.msra.mxu0 %v1509
      %1554 = vmatprep.subr.mxu0 %v1508
      %1555 = vmatpush1.msra.mxu0 %v1507
      %1556 = vmatprep.subr.mxu0 %v1506
      %1557 = vmatpush1.msra.mxu0 %v1505
      %1558 = vmatprep.subr.mxu0 %v1504
      %1559 = vmatpush1.msra.mxu0 %v1503
      %1560 = vmatprep.subr.mxu0 0.0
      %1561 = vmatpush2.msra.mxu0 0.0
      %1562 = vmatprep.subr.mxu0 0.0
      %1563 = vmatpush2.msra.mxu0 0.0
      %1564 = vmatprep.subr.mxu0 0.0
      %1565 = vmatpush2.msra.mxu0 0.0
      %1566 = vmatprep.subr.mxu0 0.0
      %1567 = vmatpush2.msra.mxu0 0.0
      %1568 = vmatprep.subr.mxu0 0.0
      %1569 = vmatpush2.msra.mxu0 0.0
      %1570 = vmatprep.subr.mxu0 0.0
      %1571 = vmatpush2.msra.mxu0 0.0
      %1572 = vmatprep.subr.mxu0 0.0
      %1573 = vmatpush2.msra.mxu0 0.0
      %1574 = vmatprep.subr.mxu0 0.0
      %1575 = vmatpush2.msra.mxu0 0.0
      %1576 = vmatprep.subr.mxu0 0.0
      %1577 = vmatpush2.msra.mxu0 0.0
      %1578 = vmatprep.subr.mxu0 0.0
      %1579 = vmatpush2.msra.mxu0 0.0
      %1580 = vmatprep.subr.mxu0 0.0
      %1581 = vmatpush2.msra.mxu0 0.0
      %1582 = vmatprep.subr.mxu0 0.0
      %1583 = vmatpush2.msra.mxu0 0.0
      %1584 = vmatprep.subr.mxu0 0.0
      %1585 = vmatpush2.msra.mxu0 0.0
      %1586 = vmatprep.subr.mxu0 0.0
      %1587 = vmatpush2.msra.mxu0 0.0
      %1588 = vmatprep.subr.mxu0 0.0
      %1589 = vmatpush2.msra.mxu0 0.0
      %1590 = vmatprep.subr.mxu0 0.0
      %1591 = vmatpush2.msra.mxu0 0.0
      %1592 = vmatprep.mubr.f32.mxu0 0.0
      %1593 = vmatmul.mubr.f32.gmra.mxu0 %v1520
      %v1594 = vpop.f32.mrf.mxu0
      %v1595 = vadd.f32 %v1516, %v1594
      %v1596 = vpop.f32.mrf.mxu0
      %v1597 = vadd.f32 %v1516, %v1596
      %1598 = vdwg.mxu0
      %v1599 = vld [vmem:[%s10] sm:$0xf]
      %1601 = vset.pattern.permute.xlu0 0
      %1602 = vperm.xlu0 %1601, %v1599
      %v1603 = vpop.permute.xlu0 %1602
      %v1605 = vmul.f32 %v1595, %v1603
      %v1606 = vmul.f32 %v1597, %v1603
      %v1607 = vld [vmem:[%s11] sm:$0xf]
      %1609 = vset.pattern.permute.xlu0 0
      %1610 = vperm.xlu0 %1609, %v1607
      %v1611 = vpop.permute.xlu0 %1610
      %v1613 = vadd.f32 %v1605, %v1611
      %v1614 = vadd.f32 %v1606, %v1611
      %v1615 = vmax.f32 %v1613, 0.0
      %v1616 = vmax.f32 %v1614, 0.0
      %v1617 = vsel %vm1149, %v1615, 0.0
      %v1618 = vsel %vm1149, %v1616, 0.0
      %v1619 = vadd.f32 %v1617, %v1618
      %1620 = vadd.xlane.f32.xlu0 %v1619
      %v1621 = vpop.xlane.xlu0 %1620
      %v1622 = vmul.f32 %v1621, %v1274
      %v1623 = vsub.f32 %v1615, %v1622
      %v1624 = vsub.f32 %v1616, %v1622
      %v1625 = vmul.f32 %v1623, %v1623
      %v1626 = vmul.f32 %v1624, %v1624
      %v1627 = vsel %vm1149, %v1625, 0.0
      %v1628 = vsel %vm1149, %v1626, 0.0
      %v1629 = vadd.f32 %v1627, %v1628
      %1630 = vadd.xlane.f32.xlu0 %v1629
      %v1631 = vpop.xlane.xlu0 %1630
      %v1632 = vmul.f32 %v1631, %v1285
      %v1633 = vadd.f32 %v1632, 0.0001
      %v1634 = vmul.f32 %v1633, 4.0
      %v1635 = vrcp.pop %v1634
      %v1636 = vmul.f32 %v1625, %v1635
      %v1637 = vmul.f32 %v1626, %v1635
      %v1638 = vadd.f32 %v1636, 0.5
      %v1639 = vadd.f32 %v1637, 0.5
      %v1640 = vsub.f32 0.0, %v1638
      %v1641 = vsub.f32 0.0, %v1639
      %v1642 = vmul.f32 %v1640, 1.442695
      %v1643 = vpow.pop %v1642
      %v1644 = vmul.f32 %v1641, 1.442695
      %v1645 = vpow.pop %v1644
      %v1646 = vadd.f32 %v1643, 1.0
      %v1647 = vadd.f32 %v1645, 1.0
      %v1648 = vrcp.pop %v1646
      %v1649 = vrcp.pop %v1647
      %v1650 = vmul.f32 %v1615, %v1648
      %v1651 = vmul.f32 %v1616, %v1649
      %v1654 = vcombine.low %v1650, %v1651
      %1656 = vst [vmem:[%s413] sm:$0xff] %v1654
      %p1657 = scmp.lt.s32.totalorder %s23, 1
      %s1658 = scalar_select %p1657, %s23, 1
      %s1659 = smul.addr %s1658, 2
      %s1660 = smul.addr %s1659, 4
      %s1661 = scalar_lea.vmem %s12, %s1660
      // Predicated region
      $region69: #{bfam_forward.1} parent=67 // pred_check
        %p1662 = pneg %p298
      $region70: #{bfam_forward.1} parent=67 // pred_check_branch
        %1664 = sbr.rel (%p1662) target = $region72
      $region71: #{bfam_forward.1} parent=67 // pred_region
        _
      $region72: #{bfam_forward.1} parent=67 // pred_fallthru
        _
    $region68: #{bfam_forward.1} parent=5 // pred_fallthru
      _
    %p1665 = scmp.le.s32.totalorder 2, %s18
    // Predicated region
    $region73: #{bfam_forward.1} parent=5 // pred_check
      %p1666 = pneg %p1665
    $region74: #{bfam_forward.1} parent=5 // pred_check_branch
      %1668 = sbr.rel (%p1666) target = $region76
    $region75: #{bfam_forward.1} parent=5 // pred_region
      %s1669 = ssub.s32 %s18, 2
      // Predicated region
      $region77: #{bfam_forward.1} parent=75 // pred_check
        %p1670 = pneg %p304
      $region78: #{bfam_forward.1} parent=75 // pred_check_branch
        %1672 = sbr.rel (%p1670) target = $region80
      $region79: #{bfam_forward.1} parent=75 // pred_region
        %p1673 = scmp.lt.s32.totalorder %s24, 1
        %s1674 = scalar_select %p1673, %s24, 1
        %s1675 = smul.addr %s1674, 2
        %s1676 = smul.addr %s1675, 4
        %s1677 = scalar_lea.vmem %s12, %s1676
      $region80: #{bfam_forward.1} parent=75 // pred_fallthru
        _
    $region76: #{bfam_forward.1} parent=5 // pred_fallthru
      _
  $region6: #{bfam_forward.1} parent=0 // loop_footer
    %s22 = sadd.s32 1, %s18
  $region7: #{bfam_forward.1} parent=0 // loop_footer_branch
    %17 = sbr.rel target = $region3
  $region8: #{bfam_forward.1} parent=0 // loop_exit
    _

</llo_original>
